<compile_context>
chip_gen: v6e
topology: v6e:2x2x1
jax: 0.10.0
libtpu: 0.0.40
codegen_flags: <defaults>
</compile_context>

<pallas_src>
import jax
import jax.numpy as jnp
from jax.experimental import pallas as pl
from jax.experimental.pallas import tpu as pltpu

# Padded hidden widths (360 -> 384, 200 -> 256, 80 -> 128).
_H1, _H2, _H3 = 384, 256, 128

# Per-tower "tail" parameter layout (layers 2..5), all 2-D arrays:
#   w2 (384, 256) bf16 ; b2 (1, 256) f32
#   w3 (256, 128) bf16 ; b3 (1, 128) f32
#   w4c0/w4c1 (1, 128) f32  (columns of the 80->2 layer, zero-padded to 128)
#   b4c0/b4c1 (1, 1) f32 ; w5c0/w5c1 (1, 1) f32 ; b5 (1, 1) f32
_TOWER_PARAM_ORDER = ("w2", "b2", "w3", "b3",
                      "w4c0", "w4c1", "b4c0", "b4c1", "w5c0", "w5c1", "b5")
_N_TOWER_PARAMS = len(_TOWER_PARAM_ORDER)


def _round_up(x, m):
    return ((x + m - 1) // m) * m


def _pad2d(a, rows, cols):
    return jnp.pad(a, ((0, rows - a.shape[0]), (0, cols - a.shape[1])))


def _choose_tile_b(B, tile_b):
    """8-aligned batch tile, capped at the padded batch; on v7x keep >= 2 grid
    steps so the 'parallel' axis shards across both TensorCores."""
    B8 = _round_up(B, 8)
    tile = min(_round_up(max(tile_b, 8), 8), B8)
    if B8 >= 16:
        tile = min(tile, _round_up(pl.cdiv(B8, 2), 8))
    return tile


def _tower_tail(h1, p):
    """Layers 2..5 of one IPS tower on an f32 (tile_b, 384) activation block."""
    f32 = jnp.float32
    h = jnp.maximum(
        jnp.dot(h1.astype(jnp.bfloat16), p["w2"], preferred_element_type=f32)
        + p["b2"], 0.0)
    h = jnp.maximum(
        jnp.dot(h.astype(jnp.bfloat16), p["w3"], preferred_element_type=f32)
        + p["b3"], 0.0)
    # Layers 4 (128->2) and 5 (2->1) are far too narrow for the MXU: do them on
    # the VPU/XLU as broadcast-multiply + lane reduction + FMA.
    c0 = jnp.sum(h * p["w4c0"], axis=-1, keepdims=True) + p["b4c0"]
    c1 = jnp.sum(h * p["w4c1"], axis=-1, keepdims=True) + p["b4c1"]
    return (jnp.maximum(c0, 0.0) * p["w5c0"]
            + jnp.maximum(c1, 0.0) * p["w5c1"] + p["b5"])        # (tile_b, 1)


def _fused_towers_kernel(z_ref, w1_ref, b1_ref, *refs):
    """Both towers (CVR, CTR) for one batch tile; lane-packed (tile_b, 2) out."""
    assert len(refs) == 2 * _N_TOWER_PARAMS + 1
    out_ref = refs[-1]
    cvr = dict(zip(_TOWER_PARAM_ORDER,
                   (r[...] for r in refs[:_N_TOWER_PARAMS])))
    ctr = dict(zip(_TOWER_PARAM_ORDER,
                   (r[...] for r in refs[_N_TOWER_PARAMS:2 * _N_TOWER_PARAMS])))

    # One fused layer-1 matmul for BOTH towers: (tile_b, 2k) @ (2k, 768) bf16,
    # f32 accumulation; bias + ReLU in f32.
    h1 = jnp.dot(z_ref[...], w1_ref[...], preferred_element_type=jnp.float32)
    h1 = jnp.maximum(h1 + b1_ref[...], 0.0)

    out_cvr = _tower_tail(h1[:, :_H1], cvr)        # (tile_b, 1) f32
    out_ctr = _tower_tail(h1[:, _H1:], ctr)        # (tile_b, 1) f32

    # Lane-pack [cvr, ctr] into one (tile_b, 2) block with a single full-block
    # store.  Built from an in-kernel iota (no captured jnp constants).
    lane = jax.lax.broadcasted_iota(jnp.int32, out_ref.shape, dimension=1)
    out_ref[...] = jnp.where(lane == 0, out_cvr, out_ctr).astype(out_ref.dtype)


def multi_ips_towers(z, shared, cvr_params, ctr_params, *, tile_b):
    """Fused CVR+CTR towers on a pre-gathered (Bp, 2k) bf16 activation block.

    Bp must be a multiple of tile_b.  Returns (Bp, 2) f32 [cvr, ctr].
    """
    Bp, two_k = z.shape
    assert Bp % tile_b == 0

    flat = [shared["w1"], shared["b1"]]
    flat += [cvr_params[n] for n in _TOWER_PARAM_ORDER]
    flat += [ctr_params[n] for n in _TOWER_PARAM_ORDER]

    # Weight / bias blocks cover the full arrays (constant index_map -> stay
    # resident in VMEM across grid steps); only the batch dim is tiled.
    in_specs = [pl.BlockSpec((tile_b, two_k), lambda i: (i, 0))]
    in_specs += [pl.BlockSpec(t.shape, lambda i: (0, 0)) for t in flat]
    out_spec = pl.BlockSpec((tile_b, 2), lambda i: (i, 0))

    out = pl.pallas_call(
        _fused_towers_kernel,
        out_shape=jax.ShapeDtypeStruct((Bp, 2), jnp.float32),
        grid_spec=pltpu.PrefetchScalarGridSpec(
            num_scalar_prefetch=0,
            grid=(Bp // tile_b,),
            in_specs=in_specs,
            out_specs=out_spec,
        ),
        compiler_params=pltpu.CompilerParams(
            dimension_semantics=("parallel",),
            vmem_limit_bytes=32 * 1024 * 1024),
    )(z, *flat)
    return out


def init_tower_params_raw(key, embedding_k):
    """Synthetic torch-Linear-like init; weights stored (in_features, out_features)."""
    dims = [embedding_k * 2, 360, 200, 80, 2, 1]
    params = []
    for i in range(len(dims) - 1):
        key, kw, kb = jax.random.split(key, 3)
        bound = 1.0 / float(dims[i]) ** 0.5
        w = jax.random.uniform(kw, (dims[i], dims[i + 1]),
                               minval=-bound, maxval=bound, dtype=jnp.float32)
        b = jax.random.uniform(kb, (1, dims[i + 1]),
                               minval=-bound, maxval=bound, dtype=jnp.float32)
        params.append((w, b))
    return params, key


def _prep_tower_tail(raw):
    """Zero-pad layers 2..5 to lane-aligned widths, cast MXU weights to bf16,
    split the tiny layer-4/5 params into broadcast-friendly (1, N) pieces."""
    (_, _), (w2, b2), (w3, b3), (w4, b4), (w5, b5) = raw
    w2p = _pad2d(w2, _H1, _H2)
    w3p = _pad2d(w3, _H2, _H3)
    w4p = _pad2d(w4, _H3, 2)                 # (128, 2); padded rows are zero
    return {
        "w2": w2p.astype(jnp.bfloat16),
        "b2": _pad2d(b2, 1, _H2),
        "w3": w3p.astype(jnp.bfloat16),
        "b3": _pad2d(b3, 1, _H3),
        "w4c0": w4p[:, 0:1].T,               # (1, 128) f32
        "w4c1": w4p[:, 1:2].T,               # (1, 128) f32
        "b4c0": b4[:, 0:1],                  # (1, 1)
        "b4c1": b4[:, 1:2],                  # (1, 1)
        "w5c0": w5[0:1, :],                  # (1, 1)
        "w5c1": w5[1:2, :],                  # (1, 1)
        "b5": b5,                            # (1, 1)
    }


def prep_params(cvr_raw, ctr_raw, embedding_k):
    """Fuse the two towers' layer-1 weights along the output axis (768 wide)
    and prepare the per-tower tails."""
    k2 = 2 * embedding_k
    w1c, b1c = cvr_raw[0]
    w1t, b1t = ctr_raw[0]
    w1 = jnp.concatenate([_pad2d(w1c, k2, _H1), _pad2d(w1t, k2, _H1)], axis=1)
    b1 = jnp.concatenate([_pad2d(b1c, 1, _H1), _pad2d(b1t, 1, _H1)], axis=1)
    shared = {"w1": w1.astype(jnp.bfloat16),   # (2k, 768) bf16
              "b1": b1}                        # (1, 768) f32
    return shared, _prep_tower_tail(cvr_raw), _prep_tower_tail(ctr_raw)


class MultiIpsPallas:
    """JAX/Pallas port of the MultiIps module (forward pass only)."""

    def __init__(self, num_users, num_items, embedding_k, key):
        self.num_users = num_users
        self.num_items = num_items
        self.embedding_k = embedding_k

        key, ku, ki = jax.random.split(key, 3)
        self.user_embedding = jax.random.normal(
            ku, (num_users, embedding_k), dtype=jnp.float32)
        self.item_embedding = jax.random.normal(
            ki, (num_items, embedding_k), dtype=jnp.float32)
        # bf16 copies feed the kernel path (MXU runs bf16 anyway): halves the
        # HBM traffic of the gather read + kernel read.
        self.user_embedding_bf16 = self.user_embedding.astype(jnp.bfloat16)
        self.item_embedding_bf16 = self.item_embedding.astype(jnp.bfloat16)

        self.ctr_raw, key = init_tower_params_raw(key, embedding_k)
        self.cvr_raw, key = init_tower_params_raw(key, embedding_k)
        self.shared, self.cvr_params, self.ctr_params = prep_params(
            self.cvr_raw, self.ctr_raw, embedding_k)

    def __call__(self, x, *, tile_b=1024):
        B = x.shape[0]
        tile = _choose_tile_b(B, tile_b)
        Bp = _round_up(B, tile)

        user_idx = x[:, 0].astype(jnp.int32)
        item_idx = x[:, 1].astype(jnp.int32)
        if Bp != B:
            # Pad the INDEX vectors (row 0, valid), not the activations: the
            # gather then directly produces (Bp, k) arrays with no extra HBM
            # round trip of padded activations.
            pad = Bp - B
            user_idx = jnp.pad(user_idx, (0, pad))
            item_idx = jnp.pad(item_idx, (0, pad))

        # Embedding gather + concat stays XLA glue (fused with the bf16 cast);
        # everything downstream is one fused Pallas call.
        # TODO(synk): pull the row gather itself into the kernel (scalar
        # prefetch + manual DMA) to remove one HBM round trip of activations.
        ue = jnp.take(self.user_embedding_bf16, user_idx, axis=0)
        ie = jnp.take(self.item_embedding_bf16, item_idx, axis=0)
        z = jnp.concatenate([ue, ie], axis=1)          # (Bp, 2k) bf16

        out = multi_ips_towers(z, self.shared, self.cvr_params,
                               self.ctr_params, tile_b=tile)
        out = out[:B]
        return out[:, 0:1], out[:, 1:2]


# ---------------------------------------------------------------------------
# References (pure JAX, for checking).
# ---------------------------------------------------------------------------
def _ref_matched(z_bf16, shared, cvr_p, ctr_p):
    """Mirrors the kernel math exactly (fused layer 1, padded params, bf16/f32
    mixed precision)."""
    f32 = jnp.float32
    h1 = jnp.maximum(
        jnp.dot(z_bf16, shared["w1"], preferred_element_type=f32)
        + shared["b1"], 0.0)
    return _tower_tail(h1[:, :_H1], cvr_p), _tower_tail(h1[:, _H1:], ctr_p)


def _ref_tower_f32(z, raw):
    """Exact f32 torch-equivalent math on the unpadded parameters."""
    h = z
    for (w, b) in raw[:-1]:
        h = jnp.maximum(h @ w + b, 0.0)
    w, b = raw[-1]
    return h @ w + b


if __name__ == "__main__":
    key = jax.random.PRNGKey(0)

    num_users, num_items, embedding_k = 50, 40, 32
    batch = 10  # not a multiple of the tile -> exercises index padding

    key, kmodel, ku, ki = jax.random.split(key, 4)
    model = MultiIpsPallas(num_users, num_items, embedding_k, kmodel)

    users = jax.random.randint(ku, (batch,), 0, num_users, dtype=jnp.int32)
    items = jax.random.randint(ki, (batch,), 0, num_items, dtype=jnp.int32)
    x = jnp.stack([users, items], axis=1)  # (B, 2) int32

    out_cvr, out_ctr = model(x)
    jax.block_until_ready((out_cvr, out_ctr))

    # Matched-precision reference (same fused/padded params, same bf16 path).
    ue_b = jnp.take(model.user_embedding_bf16, x[:, 0], axis=0)
    ie_b = jnp.take(model.item_embedding_bf16, x[:, 1], axis=0)
    z_b = jnp.concatenate([ue_b, ie_b], axis=1)
    ref_cvr_m, ref_ctr_m = _ref_matched(z_b, model.shared,
                                        model.cvr_params, model.ctr_params)

    # Pure-f32 torch-equivalent reference on the raw parameters.
    z_f = jnp.concatenate([jnp.take(model.user_embedding, x[:, 0], axis=0),
                           jnp.take(model.item_embedding, x[:, 1], axis=0)],
                          axis=1)
    ref_cvr_f = _ref_tower_f32(z_f, model.cvr_raw)
    ref_ctr_f = _ref_tower_f32(z_f, model.ctr_raw)

    assert out_cvr.shape == (batch, 1) and out_ctr.shape == (batch, 1)
    # Tight check vs a reference using the exact same mixed precision.
    assert jnp.allclose(out_cvr, ref_cvr_m, atol=1e-4, rtol=1e-4)
    assert jnp.allclose(out_ctr, ref_ctr_m, atol=1e-4, rtol=1e-4)
    # Loose semantic check vs the pure-f32 math (bf16 embeddings/activations
    # shift results at the ~1e-2 level, so tolerances are widened).
    assert jnp.allclose(out_cvr, ref_cvr_f, atol=1e-1, rtol=1e-1)
    assert jnp.allclose(out_ctr, ref_ctr_f, atol=1e-1, rtol=1e-1)

    print("KERNEL_OK")
</pallas_src>

<mosaic_0001>
module attributes {stable_mosaic.version = 11 : i64} {
  func.func @_fused_towers_kernel(%arg0: i32, %arg1: memref<8x64xbf16, #tpu.memory_space<vmem>>, %arg2: memref<64x768xbf16, #tpu.memory_space<vmem>>, %arg3: memref<1x768xf32, #tpu.memory_space<vmem>>, %arg4: memref<384x256xbf16, #tpu.memory_space<vmem>>, %arg5: memref<1x256xf32, #tpu.memory_space<vmem>>, %arg6: memref<256x128xbf16, #tpu.memory_space<vmem>>, %arg7: memref<1x128xf32, #tpu.memory_space<vmem>>, %arg8: memref<1x128xf32, #tpu.memory_space<vmem>>, %arg9: memref<1x128xf32, #tpu.memory_space<vmem>>, %arg10: memref<1x1xf32, #tpu.memory_space<vmem>>, %arg11: memref<1x1xf32, #tpu.memory_space<vmem>>, %arg12: memref<1x1xf32, #tpu.memory_space<vmem>>, %arg13: memref<1x1xf32, #tpu.memory_space<vmem>>, %arg14: memref<1x1xf32, #tpu.memory_space<vmem>>, %arg15: memref<384x256xbf16, #tpu.memory_space<vmem>>, %arg16: memref<1x256xf32, #tpu.memory_space<vmem>>, %arg17: memref<256x128xbf16, #tpu.memory_space<vmem>>, %arg18: memref<1x128xf32, #tpu.memory_space<vmem>>, %arg19: memref<1x128xf32, #tpu.memory_space<vmem>>, %arg20: memref<1x128xf32, #tpu.memory_space<vmem>>, %arg21: memref<1x1xf32, #tpu.memory_space<vmem>>, %arg22: memref<1x1xf32, #tpu.memory_space<vmem>>, %arg23: memref<1x1xf32, #tpu.memory_space<vmem>>, %arg24: memref<1x1xf32, #tpu.memory_space<vmem>>, %arg25: memref<1x1xf32, #tpu.memory_space<vmem>>, %arg26: memref<8x2xf32, #tpu.memory_space<vmem>>) attributes {dimension_semantics = [#tpu.dimension_semantics<parallel>], iteration_bounds = array<i64: 2>, scalar_prefetch = 0 : i64, scratch_operands = 0 : i64, tpu.core_type = #tpu.core_type<tc>, window_params = [{transform_indices = @transform_0, window_bounds = array<i64: 8, 64>}, {pipeline_mode = #tpu.pipeline_mode<synchronous>, transform_indices = @transform_1, window_bounds = array<i64: 64, 768>}, {pipeline_mode = #tpu.pipeline_mode<synchronous>, transform_indices = @transform_2, window_bounds = array<i64: 1, 768>}, {pipeline_mode = #tpu.pipeline_mode<synchronous>, transform_indices = @transform_3, window_bounds = array<i64: 384, 256>}, {pipeline_mode = #tpu.pipeline_mode<synchronous>, transform_indices = @transform_4, window_bounds = array<i64: 1, 256>}, {pipeline_mode = #tpu.pipeline_mode<synchronous>, transform_indices = @transform_5, window_bounds = array<i64: 256, 128>}, {pipeline_mode = #tpu.pipeline_mode<synchronous>, transform_indices = @transform_6, window_bounds = array<i64: 1, 128>}, {pipeline_mode = #tpu.pipeline_mode<synchronous>, transform_indices = @transform_7, window_bounds = array<i64: 1, 128>}, {pipeline_mode = #tpu.pipeline_mode<synchronous>, transform_indices = @transform_8, window_bounds = array<i64: 1, 128>}, {pipeline_mode = #tpu.pipeline_mode<synchronous>, transform_indices = @transform_9, window_bounds = array<i64: 1, 1>}, {pipeline_mode = #tpu.pipeline_mode<synchronous>, transform_indices = @transform_10, window_bounds = array<i64: 1, 1>}, {pipeline_mode = #tpu.pipeline_mode<synchronous>, transform_indices = @transform_11, window_bounds = array<i64: 1, 1>}, {pipeline_mode = #tpu.pipeline_mode<synchronous>, transform_indices = @transform_12, window_bounds = array<i64: 1, 1>}, {pipeline_mode = #tpu.pipeline_mode<synchronous>, transform_indices = @transform_13, window_bounds = array<i64: 1, 1>}, {pipeline_mode = #tpu.pipeline_mode<synchronous>, transform_indices = @transform_14, window_bounds = array<i64: 384, 256>}, {pipeline_mode = #tpu.pipeline_mode<synchronous>, transform_indices = @transform_15, window_bounds = array<i64: 1, 256>}, {pipeline_mode = #tpu.pipeline_mode<synchronous>, transform_indices = @transform_16, window_bounds = array<i64: 256, 128>}, {pipeline_mode = #tpu.pipeline_mode<synchronous>, transform_indices = @transform_17, window_bounds = array<i64: 1, 128>}, {pipeline_mode = #tpu.pipeline_mode<synchronous>, transform_indices = @transform_18, window_bounds = array<i64: 1, 128>}, {pipeline_mode = #tpu.pipeline_mode<synchronous>, transform_indices = @transform_19, window_bounds = array<i64: 1, 128>}, {pipeline_mode = #tpu.pipeline_mode<synchronous>, transform_indices = @transform_20, window_bounds = array<i64: 1, 1>}, {pipeline_mode = #tpu.pipeline_mode<synchronous>, transform_indices = @transform_21, window_bounds = array<i64: 1, 1>}, {pipeline_mode = #tpu.pipeline_mode<synchronous>, transform_indices = @transform_22, window_bounds = array<i64: 1, 1>}, {pipeline_mode = #tpu.pipeline_mode<synchronous>, transform_indices = @transform_23, window_bounds = array<i64: 1, 1>}, {pipeline_mode = #tpu.pipeline_mode<synchronous>, transform_indices = @transform_24, window_bounds = array<i64: 1, 1>}, {transform_indices = @transform_25, window_bounds = array<i64: 8, 2>}]} {
    %c0 = arith.constant 0 : index
    %c0_0 = arith.constant 0 : index
    %0 = vector.load %arg4[%c0, %c0_0] : memref<384x256xbf16, #tpu.memory_space<vmem>>, vector<384x256xbf16>
    %c0_1 = arith.constant 0 : index
    %c0_2 = arith.constant 0 : index
    %1 = vector.load %arg5[%c0_1, %c0_2] : memref<1x256xf32, #tpu.memory_space<vmem>>, vector<1x256xf32>
    %c0_3 = arith.constant 0 : index
    %c0_4 = arith.constant 0 : index
    %2 = vector.load %arg6[%c0_3, %c0_4] : memref<256x128xbf16, #tpu.memory_space<vmem>>, vector<256x128xbf16>
    %c0_5 = arith.constant 0 : index
    %c0_6 = arith.constant 0 : index
    %3 = vector.load %arg7[%c0_5, %c0_6] : memref<1x128xf32, #tpu.memory_space<vmem>>, vector<1x128xf32>
    %c0_7 = arith.constant 0 : index
    %c0_8 = arith.constant 0 : index
    %4 = vector.load %arg8[%c0_7, %c0_8] : memref<1x128xf32, #tpu.memory_space<vmem>>, vector<1x128xf32>
    %c0_9 = arith.constant 0 : index
    %c0_10 = arith.constant 0 : index
    %5 = vector.load %arg9[%c0_9, %c0_10] : memref<1x128xf32, #tpu.memory_space<vmem>>, vector<1x128xf32>
    %c0_11 = arith.constant 0 : index
    %c0_12 = arith.constant 0 : index
    %6 = vector.load %arg10[%c0_11, %c0_12] : memref<1x1xf32, #tpu.memory_space<vmem>>, vector<1x1xf32>
    %c0_13 = arith.constant 0 : index
    %c0_14 = arith.constant 0 : index
    %7 = vector.load %arg11[%c0_13, %c0_14] : memref<1x1xf32, #tpu.memory_space<vmem>>, vector<1x1xf32>
    %c0_15 = arith.constant 0 : index
    %c0_16 = arith.constant 0 : index
    %8 = vector.load %arg12[%c0_15, %c0_16] : memref<1x1xf32, #tpu.memory_space<vmem>>, vector<1x1xf32>
    %c0_17 = arith.constant 0 : index
    %c0_18 = arith.constant 0 : index
    %9 = vector.load %arg13[%c0_17, %c0_18] : memref<1x1xf32, #tpu.memory_space<vmem>>, vector<1x1xf32>
    %c0_19 = arith.constant 0 : index
    %c0_20 = arith.constant 0 : index
    %10 = vector.load %arg14[%c0_19, %c0_20] : memref<1x1xf32, #tpu.memory_space<vmem>>, vector<1x1xf32>
    %c0_21 = arith.constant 0 : index
    %c0_22 = arith.constant 0 : index
    %11 = vector.load %arg15[%c0_21, %c0_22] : memref<384x256xbf16, #tpu.memory_space<vmem>>, vector<384x256xbf16>
    %c0_23 = arith.constant 0 : index
    %c0_24 = arith.constant 0 : index
    %12 = vector.load %arg16[%c0_23, %c0_24] : memref<1x256xf32, #tpu.memory_space<vmem>>, vector<1x256xf32>
    %c0_25 = arith.constant 0 : index
    %c0_26 = arith.constant 0 : index
    %13 = vector.load %arg17[%c0_25, %c0_26] : memref<256x128xbf16, #tpu.memory_space<vmem>>, vector<256x128xbf16>
    %c0_27 = arith.constant 0 : index
    %c0_28 = arith.constant 0 : index
    %14 = vector.load %arg18[%c0_27, %c0_28] : memref<1x128xf32, #tpu.memory_space<vmem>>, vector<1x128xf32>
    %c0_29 = arith.constant 0 : index
    %c0_30 = arith.constant 0 : index
    %15 = vector.load %arg19[%c0_29, %c0_30] : memref<1x128xf32, #tpu.memory_space<vmem>>, vector<1x128xf32>
    %c0_31 = arith.constant 0 : index
    %c0_32 = arith.constant 0 : index
    %16 = vector.load %arg20[%c0_31, %c0_32] : memref<1x128xf32, #tpu.memory_space<vmem>>, vector<1x128xf32>
    %c0_33 = arith.constant 0 : index
    %c0_34 = arith.constant 0 : index
    %17 = vector.load %arg21[%c0_33, %c0_34] : memref<1x1xf32, #tpu.memory_space<vmem>>, vector<1x1xf32>
    %c0_35 = arith.constant 0 : index
    %c0_36 = arith.constant 0 : index
    %18 = vector.load %arg22[%c0_35, %c0_36] : memref<1x1xf32, #tpu.memory_space<vmem>>, vector<1x1xf32>
    %c0_37 = arith.constant 0 : index
    %c0_38 = arith.constant 0 : index
    %19 = vector.load %arg23[%c0_37, %c0_38] : memref<1x1xf32, #tpu.memory_space<vmem>>, vector<1x1xf32>
    %c0_39 = arith.constant 0 : index
    %c0_40 = arith.constant 0 : index
    %20 = vector.load %arg24[%c0_39, %c0_40] : memref<1x1xf32, #tpu.memory_space<vmem>>, vector<1x1xf32>
    %c0_41 = arith.constant 0 : index
    %c0_42 = arith.constant 0 : index
    %21 = vector.load %arg25[%c0_41, %c0_42] : memref<1x1xf32, #tpu.memory_space<vmem>>, vector<1x1xf32>
    %c0_43 = arith.constant 0 : index
    %c0_44 = arith.constant 0 : index
    %22 = vector.load %arg1[%c0_43, %c0_44] : memref<8x64xbf16, #tpu.memory_space<vmem>>, vector<8x64xbf16>
    %c0_45 = arith.constant 0 : index
    %c0_46 = arith.constant 0 : index
    %23 = vector.load %arg2[%c0_45, %c0_46] : memref<64x768xbf16, #tpu.memory_space<vmem>>, vector<64x768xbf16>
    %cst = arith.constant dense<0.000000e+00> : vector<8x768xf32>
    %24 = tpu.matmul %22, %23, %cst {dimension_numbers = #tpu.dot_dimension_numbers<[1], [0], [0], [1], [0, 0, 1, 1], [], []>} : vector<8x64xbf16>, vector<64x768xbf16>, vector<8x768xf32> -> vector<8x768xf32>
    %c0_47 = arith.constant 0 : index
    %c0_48 = arith.constant 0 : index
    %25 = vector.load %arg3[%c0_47, %c0_48] : memref<1x768xf32, #tpu.memory_space<vmem>>, vector<1x768xf32>
    %26 = vector.broadcast %25 : vector<1x768xf32> to vector<8x768xf32>
    %27 = arith.addf %24, %26 : vector<8x768xf32>
    %cst_49 = arith.constant 0.000000e+00 : f32
    %28 = vector.broadcast %cst_49 : f32 to vector<8x768xf32>
    %29 = arith.maximumf %27, %28 : vector<8x768xf32>
    %30 = vector.extract_strided_slice %29 {offsets = [0, 0], sizes = [8, 384], strides = [1, 1]} : vector<8x768xf32> to vector<8x384xf32>
    %31 = arith.truncf %30 : vector<8x384xf32> to vector<8x384xbf16>
    %cst_50 = arith.constant dense<0.000000e+00> : vector<8x256xf32>
    %32 = tpu.matmul %31, %0, %cst_50 {dimension_numbers = #tpu.dot_dimension_numbers<[1], [0], [0], [1], [0, 0, 1, 1], [], []>} : vector<8x384xbf16>, vector<384x256xbf16>, vector<8x256xf32> -> vector<8x256xf32>
    %33 = vector.broadcast %1 : vector<1x256xf32> to vector<8x256xf32>
    %34 = arith.addf %32, %33 : vector<8x256xf32>
    %cst_51 = arith.constant 0.000000e+00 : f32
    %35 = vector.broadcast %cst_51 : f32 to vector<8x256xf32>
    %36 = arith.maximumf %34, %35 : vector<8x256xf32>
    %37 = arith.truncf %36 : vector<8x256xf32> to vector<8x256xbf16>
    %cst_52 = arith.constant dense<0.000000e+00> : vector<8x128xf32>
    %38 = tpu.matmul %37, %2, %cst_52 {dimension_numbers = #tpu.dot_dimension_numbers<[1], [0], [0], [1], [0, 0, 1, 1], [], []>} : vector<8x256xbf16>, vector<256x128xbf16>, vector<8x128xf32> -> vector<8x128xf32>
    %39 = vector.broadcast %3 : vector<1x128xf32> to vector<8x128xf32>
    %40 = arith.addf %38, %39 : vector<8x128xf32>
    %cst_53 = arith.constant 0.000000e+00 : f32
    %41 = vector.broadcast %cst_53 : f32 to vector<8x128xf32>
    %42 = arith.maximumf %40, %41 : vector<8x128xf32>
    %43 = vector.broadcast %4 : vector<1x128xf32> to vector<8x128xf32>
    %44 = arith.mulf %42, %43 : vector<8x128xf32>
    %cst_54 = arith.constant dense<0.000000e+00> : vector<8xf32>
    %45 = vector.multi_reduction <add>, %44, %cst_54 [1] : vector<8x128xf32> to vector<8xf32>
    %46 = vector.shape_cast %45 : vector<8xf32> to vector<8x1xf32>
    %47 = vector.broadcast %6 : vector<1x1xf32> to vector<8x1xf32>
    %48 = arith.addf %46, %47 : vector<8x1xf32>
    %49 = vector.broadcast %5 : vector<1x128xf32> to vector<8x128xf32>
    %50 = arith.mulf %42, %49 : vector<8x128xf32>
    %cst_55 = arith.constant dense<0.000000e+00> : vector<8xf32>
    %51 = vector.multi_reduction <add>, %50, %cst_55 [1] : vector<8x128xf32> to vector<8xf32>
    %52 = vector.shape_cast %51 : vector<8xf32> to vector<8x1xf32>
    %53 = vector.broadcast %7 : vector<1x1xf32> to vector<8x1xf32>
    %54 = arith.addf %52, %53 : vector<8x1xf32>
    %cst_56 = arith.constant 0.000000e+00 : f32
    %55 = vector.broadcast %cst_56 : f32 to vector<8x1xf32>
    %56 = arith.maximumf %48, %55 : vector<8x1xf32>
    %57 = vector.broadcast %8 : vector<1x1xf32> to vector<8x1xf32>
    %58 = arith.mulf %56, %57 : vector<8x1xf32>
    %cst_57 = arith.constant 0.000000e+00 : f32
    %59 = vector.broadcast %cst_57 : f32 to vector<8x1xf32>
    %60 = arith.maximumf %54, %59 : vector<8x1xf32>
    %61 = vector.broadcast %9 : vector<1x1xf32> to vector<8x1xf32>
    %62 = arith.mulf %60, %61 : vector<8x1xf32>
    %63 = arith.addf %58, %62 : vector<8x1xf32>
    %64 = vector.broadcast %10 : vector<1x1xf32> to vector<8x1xf32>
    %65 = arith.addf %63, %64 : vector<8x1xf32>
    %66 = vector.extract_strided_slice %29 {offsets = [0, 384], sizes = [8, 384], strides = [1, 1]} : vector<8x768xf32> to vector<8x384xf32>
    %67 = arith.truncf %66 : vector<8x384xf32> to vector<8x384xbf16>
    %cst_58 = arith.constant dense<0.000000e+00> : vector<8x256xf32>
    %68 = tpu.matmul %67, %11, %cst_58 {dimension_numbers = #tpu.dot_dimension_numbers<[1], [0], [0], [1], [0, 0, 1, 1], [], []>} : vector<8x384xbf16>, vector<384x256xbf16>, vector<8x256xf32> -> vector<8x256xf32>
    %69 = vector.broadcast %12 : vector<1x256xf32> to vector<8x256xf32>
    %70 = arith.addf %68, %69 : vector<8x256xf32>
    %cst_59 = arith.constant 0.000000e+00 : f32
    %71 = vector.broadcast %cst_59 : f32 to vector<8x256xf32>
    %72 = arith.maximumf %70, %71 : vector<8x256xf32>
    %73 = arith.truncf %72 : vector<8x256xf32> to vector<8x256xbf16>
    %cst_60 = arith.constant dense<0.000000e+00> : vector<8x128xf32>
    %74 = tpu.matmul %73, %13, %cst_60 {dimension_numbers = #tpu.dot_dimension_numbers<[1], [0], [0], [1], [0, 0, 1, 1], [], []>} : vector<8x256xbf16>, vector<256x128xbf16>, vector<8x128xf32> -> vector<8x128xf32>
    %75 = vector.broadcast %14 : vector<1x128xf32> to vector<8x128xf32>
    %76 = arith.addf %74, %75 : vector<8x128xf32>
    %cst_61 = arith.constant 0.000000e+00 : f32
    %77 = vector.broadcast %cst_61 : f32 to vector<8x128xf32>
    %78 = arith.maximumf %76, %77 : vector<8x128xf32>
    %79 = vector.broadcast %15 : vector<1x128xf32> to vector<8x128xf32>
    %80 = arith.mulf %78, %79 : vector<8x128xf32>
    %cst_62 = arith.constant dense<0.000000e+00> : vector<8xf32>
    %81 = vector.multi_reduction <add>, %80, %cst_62 [1] : vector<8x128xf32> to vector<8xf32>
    %82 = vector.shape_cast %81 : vector<8xf32> to vector<8x1xf32>
    %83 = vector.broadcast %17 : vector<1x1xf32> to vector<8x1xf32>
    %84 = arith.addf %82, %83 : vector<8x1xf32>
    %85 = vector.broadcast %16 : vector<1x128xf32> to vector<8x128xf32>
    %86 = arith.mulf %78, %85 : vector<8x128xf32>
    %cst_63 = arith.constant dense<0.000000e+00> : vector<8xf32>
    %87 = vector.multi_reduction <add>, %86, %cst_63 [1] : vector<8x128xf32> to vector<8xf32>
    %88 = vector.shape_cast %87 : vector<8xf32> to vector<8x1xf32>
    %89 = vector.broadcast %18 : vector<1x1xf32> to vector<8x1xf32>
    %90 = arith.addf %88, %89 : vector<8x1xf32>
    %cst_64 = arith.constant 0.000000e+00 : f32
    %91 = vector.broadcast %cst_64 : f32 to vector<8x1xf32>
    %92 = arith.maximumf %84, %91 : vector<8x1xf32>
    %93 = vector.broadcast %19 : vector<1x1xf32> to vector<8x1xf32>
    %94 = arith.mulf %92, %93 : vector<8x1xf32>
    %cst_65 = arith.constant 0.000000e+00 : f32
    %95 = vector.broadcast %cst_65 : f32 to vector<8x1xf32>
    %96 = arith.maximumf %90, %95 : vector<8x1xf32>
    %97 = vector.broadcast %20 : vector<1x1xf32> to vector<8x1xf32>
    %98 = arith.mulf %96, %97 : vector<8x1xf32>
    %99 = arith.addf %94, %98 : vector<8x1xf32>
    %100 = vector.broadcast %21 : vector<1x1xf32> to vector<8x1xf32>
    %101 = arith.addf %99, %100 : vector<8x1xf32>
    %102 = tpu.iota {dimensions = array<i32: 1>} : vector<8x2xi32>
    %c0_i32 = arith.constant 0 : i32
    %103 = vector.broadcast %c0_i32 : i32 to vector<8x2xi32>
    %104 = arith.cmpi eq, %102, %103 : vector<8x2xi32>
    %105 = vector.shape_cast %65 : vector<8x1xf32> to vector<8x1xf32>
    %106 = vector.broadcast %105 : vector<8x1xf32> to vector<8x2xf32>
    %107 = vector.shape_cast %101 : vector<8x1xf32> to vector<8x1xf32>
    %108 = vector.broadcast %107 : vector<8x1xf32> to vector<8x2xf32>
    %109 = arith.select %104, %106, %108 : vector<8x2xi1>, vector<8x2xf32>
    %c0_66 = arith.constant 0 : index
    %c0_67 = arith.constant 0 : index
    %110 = vector.load %arg26[%c0_66, %c0_67] : memref<8x2xf32, #tpu.memory_space<vmem>>, vector<8x2xf32>
    tpu.vector_store %arg26[%c0_66, %c0_67], %109 {strides = array<i32>} : memref<8x2xf32, #tpu.memory_space<vmem>>, vector<8x2xf32>,
    return
  }
  func.func @transform_0(%arg0: i32) -> (i32, i32) {
    %c0_i32 = arith.constant 0 : i32
    %c0_i32_0 = arith.constant 0 : i32
    return %arg0, %c0_i32 : i32, i32
  }
  func.func @transform_1(%arg0: i32) -> (i32, i32) {
    %c0_i32 = arith.constant 0 : i32
    %c0_i32_0 = arith.constant 0 : i32
    %c0_i32_1 = arith.constant 0 : i32
    return %c0_i32, %c0_i32_0 : i32, i32
  }
  func.func @transform_2(%arg0: i32) -> (i32, i32) {
    %c0_i32 = arith.constant 0 : i32
    %c0_i32_0 = arith.constant 0 : i32
    %c0_i32_1 = arith.constant 0 : i32
    return %c0_i32, %c0_i32_0 : i32, i32
  }
  func.func @transform_3(%arg0: i32) -> (i32, i32) {
    %c0_i32 = arith.constant 0 : i32
    %c0_i32_0 = arith.constant 0 : i32
    %c0_i32_1 = arith.constant 0 : i32
    return %c0_i32, %c0_i32_0 : i32, i32
  }
  func.func @transform_4(%arg0: i32) -> (i32, i32) {
    %c0_i32 = arith.constant 0 : i32
    %c0_i32_0 = arith.constant 0 : i32
    %c0_i32_1 = arith.constant 0 : i32
    return %c0_i32, %c0_i32_0 : i32, i32
  }
  func.func @transform_5(%arg0: i32) -> (i32, i32) {
    %c0_i32 = arith.constant 0 : i32
    %c0_i32_0 = arith.constant 0 : i32
    %c0_i32_1 = arith.constant 0 : i32
    return %c0_i32, %c0_i32_0 : i32, i32
  }
  func.func @transform_6(%arg0: i32) -> (i32, i32) {
    %c0_i32 = arith.constant 0 : i32
    %c0_i32_0 = arith.constant 0 : i32
    %c0_i32_1 = arith.constant 0 : i32
    return %c0_i32, %c0_i32_0 : i32, i32
  }
  func.func @transform_7(%arg0: i32) -> (i32, i32) {
    %c0_i32 = arith.constant 0 : i32
    %c0_i32_0 = arith.constant 0 : i32
    %c0_i32_1 = arith.constant 0 : i32
    return %c0_i32, %c0_i32_0 : i32, i32
  }
  func.func @transform_8(%arg0: i32) -> (i32, i32) {
    %c0_i32 = arith.constant 0 : i32
    %c0_i32_0 = arith.constant 0 : i32
    %c0_i32_1 = arith.constant 0 : i32
    return %c0_i32, %c0_i32_0 : i32, i32
  }
  func.func @transform_9(%arg0: i32) -> (i32, i32) {
    %c0_i32 = arith.constant 0 : i32
    %c0_i32_0 = arith.constant 0 : i32
    %c0_i32_1 = arith.constant 0 : i32
    return %c0_i32, %c0_i32_0 : i32, i32
  }
  func.func @transform_10(%arg0: i32) -> (i32, i32) {
    %c0_i32 = arith.constant 0 : i32
    %c0_i32_0 = arith.constant 0 : i32
    %c0_i32_1 = arith.constant 0 : i32
    return %c0_i32, %c0_i32_0 : i32, i32
  }
  func.func @transform_11(%arg0: i32) -> (i32, i32) {
    %c0_i32 = arith.constant 0 : i32
    %c0_i32_0 = arith.constant 0 : i32
    %c0_i32_1 = arith.constant 0 : i32
    return %c0_i32, %c0_i32_0 : i32, i32
  }
  func.func @transform_12(%arg0: i32) -> (i32, i32) {
    %c0_i32 = arith.constant 0 : i32
    %c0_i32_0 = arith.constant 0 : i32
    %c0_i32_1 = arith.constant 0 : i32
    return %c0_i32, %c0_i32_0 : i32, i32
  }
  func.func @transform_13(%arg0: i32) -> (i32, i32) {
    %c0_i32 = arith.constant 0 : i32
    %c0_i32_0 = arith.constant 0 : i32
    %c0_i32_1 = arith.constant 0 : i32
    return %c0_i32, %c0_i32_0 : i32, i32
  }
  func.func @transform_14(%arg0: i32) -> (i32, i32) {
    %c0_i32 = arith.constant 0 : i32
    %c0_i32_0 = arith.constant 0 : i32
    %c0_i32_1 = arith.constant 0 : i32
    return %c0_i32, %c0_i32_0 : i32, i32
  }
  func.func @transform_15(%arg0: i32) -> (i32, i32) {
    %c0_i32 = arith.constant 0 : i32
    %c0_i32_0 = arith.constant 0 : i32
    %c0_i32_1 = arith.constant 0 : i32
    return %c0_i32, %c0_i32_0 : i32, i32
  }
  func.func @transform_16(%arg0: i32) -> (i32, i32) {
    %c0_i32 = arith.constant 0 : i32
    %c0_i32_0 = arith.constant 0 : i32
    %c0_i32_1 = arith.constant 0 : i32
    return %c0_i32, %c0_i32_0 : i32, i32
  }
  func.func @transform_17(%arg0: i32) -> (i32, i32) {
    %c0_i32 = arith.constant 0 : i32
    %c0_i32_0 = arith.constant 0 : i32
    %c0_i32_1 = arith.constant 0 : i32
    return %c0_i32, %c0_i32_0 : i32, i32
  }
  func.func @transform_18(%arg0: i32) -> (i32, i32) {
    %c0_i32 = arith.constant 0 : i32
    %c0_i32_0 = arith.constant 0 : i32
    %c0_i32_1 = arith.constant 0 : i32
    return %c0_i32, %c0_i32_0 : i32, i32
  }
  func.func @transform_19(%arg0: i32) -> (i32, i32) {
    %c0_i32 = arith.constant 0 : i32
    %c0_i32_0 = arith.constant 0 : i32
    %c0_i32_1 = arith.constant 0 : i32
    return %c0_i32, %c0_i32_0 : i32, i32
  }
  func.func @transform_20(%arg0: i32) -> (i32, i32) {
    %c0_i32 = arith.constant 0 : i32
    %c0_i32_0 = arith.constant 0 : i32
    %c0_i32_1 = arith.constant 0 : i32
    return %c0_i32, %c0_i32_0 : i32, i32
  }
  func.func @transform_21(%arg0: i32) -> (i32, i32) {
    %c0_i32 = arith.constant 0 : i32
    %c0_i32_0 = arith.constant 0 : i32
    %c0_i32_1 = arith.constant 0 : i32
    return %c0_i32, %c0_i32_0 : i32, i32
  }
  func.func @transform_22(%arg0: i32) -> (i32, i32) {
    %c0_i32 = arith.constant 0 : i32
    %c0_i32_0 = arith.constant 0 : i32
    %c0_i32_1 = arith.constant 0 : i32
    return %c0_i32, %c0_i32_0 : i32, i32
  }
  func.func @transform_23(%arg0: i32) -> (i32, i32) {
    %c0_i32 = arith.constant 0 : i32
    %c0_i32_0 = arith.constant 0 : i32
    %c0_i32_1 = arith.constant 0 : i32
    return %c0_i32, %c0_i32_0 : i32, i32
  }
  func.func @transform_24(%arg0: i32) -> (i32, i32) {
    %c0_i32 = arith.constant 0 : i32
    %c0_i32_0 = arith.constant 0 : i32
    %c0_i32_1 = arith.constant 0 : i32
    return %c0_i32, %c0_i32_0 : i32, i32
  }
  func.func @transform_25(%arg0: i32) -> (i32, i32) {
    %c0_i32 = arith.constant 0 : i32
    %c0_i32_0 = arith.constant 0 : i32
    return %arg0, %c0_i32 : i32, i32
  }
}

</mosaic_0001>

<llo_original>
// kernel: tpu_custom_call.1
$region0: #{tpu_custom_call.1}
  #allocation0 [shape = 'u32[]', space=smem, size = 0x4, offset = 0x4, fixed_abs, tag = 'smem constant byte address 0x4 - core index']
  #allocation1 [shape = 'u32[144,128]{1,0:T(1,128)}', space=vmem, size = 0x12000, scoped, tag = 'internal scratch']
  #allocation2 [shape = 'f32[1,1]{1,0:T(1,128)S(1)}', space=vmem, size = 0x200, scoped, tag = 'scoped memory for tpu_custom_call.1']
  #allocation3 [shape = 'f32[1,1]{1,0:T(1,128)S(1)}', space=vmem, size = 0x200, scoped, tag = 'scoped memory for tpu_custom_call.1']
  #allocation4 [shape = 'f32[1,1]{1,0:T(1,128)S(1)}', space=vmem, size = 0x200, scoped, tag = 'scoped memory for tpu_custom_call.1']
  #allocation5 [shape = 'f32[1,1]{1,0:T(1,128)S(1)}', space=vmem, size = 0x200, scoped, tag = 'scoped memory for tpu_custom_call.1']
  #allocation6 [shape = 'f32[1,1]{1,0:T(1,128)S(1)}', space=vmem, size = 0x200, scoped, tag = 'scoped memory for tpu_custom_call.1']
  #allocation7 [shape = 'f32[1,1]{1,0:T(1,128)S(1)}', space=vmem, size = 0x200, scoped, tag = 'scoped memory for tpu_custom_call.1']
  #allocation8 [shape = 'f32[1,1]{1,0:T(1,128)S(1)}', space=vmem, size = 0x200, scoped, tag = 'scoped memory for tpu_custom_call.1']
  #allocation9 [shape = 'f32[1,1]{1,0:T(1,128)S(1)}', space=vmem, size = 0x200, scoped, tag = 'scoped memory for tpu_custom_call.1']
  #allocation10 [shape = 'f32[1,1]{1,0:T(1,128)S(1)}', space=vmem, size = 0x200, scoped, tag = 'scoped memory for tpu_custom_call.1']
  #allocation11 [shape = 'f32[1,1]{1,0:T(1,128)S(1)}', space=vmem, size = 0x200, scoped, tag = 'scoped memory for tpu_custom_call.1']
  %s0 = inlined_call_operand.vmem [shape: bf16[16,64], index: 0, kind: input, shape index: {}]
  %s1 = inlined_call_operand.hbm [shape: bf16[64,768], index: 1, kind: input, shape index: {}]
  %s2 = inlined_call_operand.vmem [shape: f32[1,768], index: 2, kind: input, shape index: {}]
  %s3 = inlined_call_operand.hbm [shape: bf16[384,256], index: 3, kind: input, shape index: {}]
  %s4 = inlined_call_operand.vmem [shape: f32[1,256], index: 4, kind: input, shape index: {}]
  %s5 = inlined_call_operand.hbm [shape: bf16[256,128], index: 5, kind: input, shape index: {}]
  %s6 = inlined_call_operand.vmem [shape: f32[1,128], index: 6, kind: input, shape index: {}]
  %s7 = inlined_call_operand.vmem [shape: f32[1,128], index: 7, kind: input, shape index: {}]
  %s8 = inlined_call_operand.vmem [shape: f32[1,128], index: 8, kind: input, shape index: {}]
  %s9 = inlined_call_operand.<no memory space> [shape: f32[1,1], index: 9, kind: input, shape index: {}]
  %s10 = inlined_call_operand.<no memory space> [shape: f32[1,1], index: 10, kind: input, shape index: {}]
  %s11 = inlined_call_operand.<no memory space> [shape: f32[1,1], index: 11, kind: input, shape index: {}]
  %s12 = inlined_call_operand.<no memory space> [shape: f32[1,1], index: 12, kind: input, shape index: {}]
  %s13 = inlined_call_operand.<no memory space> [shape: f32[1,1], index: 13, kind: input, shape index: {}]
  %s14 = inlined_call_operand.hbm [shape: bf16[384,256], index: 14, kind: input, shape index: {}]
  %s15 = inlined_call_operand.vmem [shape: f32[1,256], index: 15, kind: input, shape index: {}]
  %s16 = inlined_call_operand.hbm [shape: bf16[256,128], index: 16, kind: input, shape index: {}]
  %s17 = inlined_call_operand.vmem [shape: f32[1,128], index: 17, kind: input, shape index: {}]
  %s18 = inlined_call_operand.vmem [shape: f32[1,128], index: 18, kind: input, shape index: {}]
  %s19 = inlined_call_operand.vmem [shape: f32[1,128], index: 19, kind: input, shape index: {}]
  %s20 = inlined_call_operand.<no memory space> [shape: f32[1,1], index: 20, kind: input, shape index: {}]
  %s21 = inlined_call_operand.<no memory space> [shape: f32[1,1], index: 21, kind: input, shape index: {}]
  %s22 = inlined_call_operand.<no memory space> [shape: f32[1,1], index: 22, kind: input, shape index: {}]
  %s23 = inlined_call_operand.<no memory space> [shape: f32[1,1], index: 23, kind: input, shape index: {}]
  %s24 = inlined_call_operand.<no memory space> [shape: f32[1,1], index: 24, kind: input, shape index: {}]
  %s25 = inlined_call_operand.vmem [shape: f32[16,2], index: 25, kind: output, shape index: {}]
  %s26 = sld [smem:[#allocation0]]
  $region153: #{tpu_custom_call.1} parent=0
    _
  %s28 = ssub.s32 1, %s26
  %s29 = scalar_select 0, %s28, %s26
  %v30 = vstv %s9
  %31 = vst [vmem:[#allocation2] sm:$0x1] %v30
  %v32 = vstv %s10
  %33 = vst [vmem:[#allocation3] sm:$0x1] %v32
  %v34 = vstv %s11
  %35 = vst [vmem:[#allocation4] sm:$0x1] %v34
  %v36 = vstv %s12
  %37 = vst [vmem:[#allocation5] sm:$0x1] %v36
  %v38 = vstv %s13
  %39 = vst [vmem:[#allocation6] sm:$0x1] %v38
  %v40 = vstv %s20
  %41 = vst [vmem:[#allocation7] sm:$0x1] %v40
  %v42 = vstv %s21
  %43 = vst [vmem:[#allocation8] sm:$0x1] %v42
  %v44 = vstv %s22
  %45 = vst [vmem:[#allocation9] sm:$0x1] %v44
  %v46 = vstv %s23
  %47 = vst [vmem:[#allocation10] sm:$0x1] %v46
  %v48 = vstv %s24
  %49 = vst [vmem:[#allocation11] sm:$0x1] %v48
  $region1: #{tpu_custom_call.1} parent=0
    #allocation12 [shape = 'u8[98304]{0}', space=vmem, size = 0x18000, scoped, tag = 'input window, operand 1, single buffered']
    #allocation13 [shape = 's32[2]{0}', space=sflag, size = 0x8, scoped, tag = 'scoped memory for tpu_custom_call.1']
    #allocation14 [shape = 'u8[196608]{0}', space=vmem, size = 0x30000, scoped, tag = 'input window, operand 3, single buffered']
    #allocation15 [shape = 's32[1]{0}', space=sflag, size = 0x4, scoped, tag = 'scoped memory for tpu_custom_call.1']
    #allocation16 [shape = 'u8[65536]{0}', space=vmem, size = 0x10000, scoped, tag = 'input window, operand 5, single buffered']
    #allocation17 [shape = 'u8[196608]{0}', space=vmem, size = 0x30000, scoped, tag = 'input window, operand 14, single buffered']
    #allocation18 [shape = 's32[1]{0}', space=sflag, size = 0x4, scoped, tag = 'scoped memory for tpu_custom_call.1']
    #allocation19 [shape = 'u8[65536]{0}', space=vmem, size = 0x10000, scoped, tag = 'input window, operand 16, single buffered']
    %50 = vsyncpa [#allocation13], 0
    %51 = vsyncpa [#allocation15], 0
    %52 = vsyncpa [#allocation18], 0
    loop: start=0, step=1, limit=4
    $region2: #{tpu_custom_call.1} parent=1 // loop_pre_header
      _
    $region3: #{tpu_custom_call.1} parent=1 // loop_header
      %s54 = sphi 0, %s58
      %p55 = scmp.ge.s32.totalorder %s54, 4
      %s64 = sphi 0, %s66
      %s67 = sphi 0, %s64
      %s68 = sphi 0, %s67
      %s84 = sphi 0, %s68
      %s88 = sphi 0, %s88
      %s90 = sphi 0, %s88
      %s91 = sphi 0, %s90
      %s105 = sphi 0, %s91
      %s109 = sphi 0, %s109
      %s111 = sphi 0, %s109
      %s112 = sphi 0, %s111
      %s126 = sphi 0, %s112
      %s130 = sphi 0, %s130
      %s132 = sphi 0, %s130
      %s133 = sphi 0, %s132
      %s147 = sphi 0, %s133
      %s151 = sphi 0, %s151
      %s153 = sphi 0, %s151
      %s154 = sphi 0, %s153
      %s168 = sphi 0, %s154
      %s172 = sphi 0, %s172
      %s174 = sphi 0, %s172
      %s175 = sphi 0, %s174
      %s189 = sphi 0, %s175
      %s193 = sphi 0, %s193
      %s195 = sphi 0, %s193
      %s196 = sphi 0, %s195
      %s210 = sphi 0, %s196
      %s214 = sphi 0, %s214
      %s216 = sphi 0, %s214
      %s217 = sphi 0, %s216
      %s231 = sphi 0, %s217
      %s235 = sphi 0, %s235
      %s237 = sphi 0, %s235
      %s238 = sphi 0, %s237
      %s252 = sphi 0, %s238
      %s256 = sphi 0, %s256
      %s258 = sphi 0, %s256
      %s259 = sphi 0, %s258
      %s273 = sphi 0, %s259
      %s277 = sphi 0, %s277
      %s279 = sphi 0, %s277
      %s280 = sphi 0, %s279
      %s294 = sphi 0, %s280
      %s298 = sphi 0, %s298
      %s300 = sphi 0, %s298
      %s301 = sphi 0, %s300
      %s315 = sphi 0, %s301
      %s319 = sphi 0, %s319
      %s321 = sphi 0, %s319
      %s322 = sphi 0, %s321
      %s336 = sphi 0, %s322
      %s340 = sphi 0, %s340
      %s342 = sphi 0, %s340
      %s343 = sphi 0, %s342
      %s357 = sphi 0, %s343
      %s361 = sphi 0, %s361
      %s363 = sphi 0, %s361
      %s364 = sphi 0, %s363
      %s378 = sphi 0, %s364
      %s382 = sphi 0, %s382
      %s384 = sphi 0, %s382
      %s385 = sphi 0, %s384
      %s399 = sphi 0, %s385
      %s403 = sphi 0, %s403
      %s405 = sphi 0, %s403
      %s406 = sphi 0, %s405
      %s420 = sphi 0, %s406
      %s424 = sphi 0, %s424
      %s426 = sphi 0, %s424
      %s427 = sphi 0, %s426
      %s441 = sphi 0, %s427
      %s445 = sphi 0, %s445
      %s447 = sphi 0, %s445
      %s448 = sphi 0, %s447
      %s462 = sphi 0, %s448
      %s466 = sphi 0, %s466
      %s468 = sphi 0, %s466
      %s469 = sphi 0, %s468
      %s483 = sphi 0, %s469
      %s487 = sphi 0, %s487
      %s489 = sphi 0, %s487
      %s490 = sphi 0, %s489
      %s504 = sphi 0, %s490
      %s508 = sphi 0, %s508
      %s510 = sphi 0, %s508
      %s511 = sphi 0, %s510
      %s525 = sphi 0, %s511
      %s529 = sphi 0, %s529
      %s531 = sphi 0, %s529
      %s532 = sphi 0, %s531
      %s546 = sphi 0, %s532
      %s550 = sphi 0, %s550
      %s552 = sphi 0, %s550
      %s553 = sphi 0, %s552
      %s567 = sphi 0, %s553
      %s571 = sphi 0, %s571
      %s573 = sphi 0, %s571
      %s574 = sphi 0, %s573
      %s588 = sphi 0, %s574
      %s594 = sphi 0, %s596
      %s597 = sphi 0, %s594
      %s598 = sphi 0, %s597
      %s614 = sphi 0, %s598
    $region4: #{tpu_custom_call.1} parent=1 // loop_header_branch
      %57 = sbr.rel (%p55) target = $region8
    $region5: #{tpu_custom_call.1} parent=1 // loop_body
      %s59 = ssub.s32 %s54, 1
      %s60 = ssub.s32 %s54, 2
      %s61 = sadd.s32 %s54, 1
      %s62 = ssub.s32 %s54, %s61
      %p63 = scmp.eq.s32.totalorder %s62, 0
      %s65 = sadd.s32 %s64, 1
      %s66 = scalar_select %p63, %s64, %s65
      %p69 = pneg %p63
      %p70 = scmp.eq.s32.totalorder %s54, 1
      %p71 = por %p69, %p70
      %p72 = scmp.ne.s32.totalorder %s64, %s67
      %p73 = scmp.eq.s32.totalorder %s54, 0
      %p74 = por %p72, %p73
      %p75 = scmp.ne.s32.totalorder %s64, %s67
      %p76 = scmp.eq.s32.totalorder %s59, 1
      %p77 = por %p75, %p76
      %p78 = scmp.ne.s32.totalorder %s67, %s68
      %p79 = scmp.eq.s32.totalorder %s59, 0
      %p80 = por %p78, %p79
      %p81 = scmp.ne.s32.totalorder %s67, %s68
      %p82 = scmp.eq.s32.totalorder %s60, 1
      %p83 = por %p81, %p82
      %p85 = scmp.ne.s32.totalorder %s68, %s84
      %p86 = scmp.eq.s32.totalorder %s60, 0
      %p87 = por %p85, %p86
      %s89 = sadd.s32 %s88, 1
      %p92 = scmp.eq.s32.totalorder %s54, 1
      %p93 = scmp.ne.s32.totalorder %s88, %s90
      %p94 = scmp.eq.s32.totalorder %s54, 0
      %p95 = por %p93, %p94
      %p96 = scmp.ne.s32.totalorder %s88, %s90
      %p97 = scmp.eq.s32.totalorder %s59, 1
      %p98 = por %p96, %p97
      %p99 = scmp.ne.s32.totalorder %s90, %s91
      %p100 = scmp.eq.s32.totalorder %s59, 0
      %p101 = por %p99, %p100
      %p102 = scmp.ne.s32.totalorder %s90, %s91
      %p103 = scmp.eq.s32.totalorder %s60, 1
      %p104 = por %p102, %p103
      %p106 = scmp.ne.s32.totalorder %s91, %s105
      %p107 = scmp.eq.s32.totalorder %s60, 0
      %p108 = por %p106, %p107
      %s110 = sadd.s32 %s109, 1
      %p113 = scmp.eq.s32.totalorder %s54, 1
      %p114 = scmp.ne.s32.totalorder %s109, %s111
      %p115 = scmp.eq.s32.totalorder %s54, 0
      %p116 = por %p114, %p115
      %p117 = scmp.ne.s32.totalorder %s109, %s111
      %p118 = scmp.eq.s32.totalorder %s59, 1
      %p119 = por %p117, %p118
      %p120 = scmp.ne.s32.totalorder %s111, %s112
      %p121 = scmp.eq.s32.totalorder %s59, 0
      %p122 = por %p120, %p121
      %p123 = scmp.ne.s32.totalorder %s111, %s112
      %p124 = scmp.eq.s32.totalorder %s60, 1
      %p125 = por %p123, %p124
      %p127 = scmp.ne.s32.totalorder %s112, %s126
      %p128 = scmp.eq.s32.totalorder %s60, 0
      %p129 = por %p127, %p128
      %s131 = sadd.s32 %s130, 1
      %p134 = scmp.eq.s32.totalorder %s54, 1
      %p135 = scmp.ne.s32.totalorder %s130, %s132
      %p136 = scmp.eq.s32.totalorder %s54, 0
      %p137 = por %p135, %p136
      %p138 = scmp.ne.s32.totalorder %s130, %s132
      %p139 = scmp.eq.s32.totalorder %s59, 1
      %p140 = por %p138, %p139
      %p141 = scmp.ne.s32.totalorder %s132, %s133
      %p142 = scmp.eq.s32.totalorder %s59, 0
      %p143 = por %p141, %p142
      %p144 = scmp.ne.s32.totalorder %s132, %s133
      %p145 = scmp.eq.s32.totalorder %s60, 1
      %p146 = por %p144, %p145
      %p148 = scmp.ne.s32.totalorder %s133, %s147
      %p149 = scmp.eq.s32.totalorder %s60, 0
      %p150 = por %p148, %p149
      %s152 = sadd.s32 %s151, 1
      %p155 = scmp.eq.s32.totalorder %s54, 1
      %p156 = scmp.ne.s32.totalorder %s151, %s153
      %p157 = scmp.eq.s32.totalorder %s54, 0
      %p158 = por %p156, %p157
      %p159 = scmp.ne.s32.totalorder %s151, %s153
      %p160 = scmp.eq.s32.totalorder %s59, 1
      %p161 = por %p159, %p160
      %p162 = scmp.ne.s32.totalorder %s153, %s154
      %p163 = scmp.eq.s32.totalorder %s59, 0
      %p164 = por %p162, %p163
      %p165 = scmp.ne.s32.totalorder %s153, %s154
      %p166 = scmp.eq.s32.totalorder %s60, 1
      %p167 = por %p165, %p166
      %p169 = scmp.ne.s32.totalorder %s154, %s168
      %p170 = scmp.eq.s32.totalorder %s60, 0
      %p171 = por %p169, %p170
      %s173 = sadd.s32 %s172, 1
      %p176 = scmp.eq.s32.totalorder %s54, 1
      %p177 = scmp.ne.s32.totalorder %s172, %s174
      %p178 = scmp.eq.s32.totalorder %s54, 0
      %p179 = por %p177, %p178
      %p180 = scmp.ne.s32.totalorder %s172, %s174
      %p181 = scmp.eq.s32.totalorder %s59, 1
      %p182 = por %p180, %p181
      %p183 = scmp.ne.s32.totalorder %s174, %s175
      %p184 = scmp.eq.s32.totalorder %s59, 0
      %p185 = por %p183, %p184
      %p186 = scmp.ne.s32.totalorder %s174, %s175
      %p187 = scmp.eq.s32.totalorder %s60, 1
      %p188 = por %p186, %p187
      %p190 = scmp.ne.s32.totalorder %s175, %s189
      %p191 = scmp.eq.s32.totalorder %s60, 0
      %p192 = por %p190, %p191
      %s194 = sadd.s32 %s193, 1
      %p197 = scmp.eq.s32.totalorder %s54, 1
      %p198 = scmp.ne.s32.totalorder %s193, %s195
      %p199 = scmp.eq.s32.totalorder %s54, 0
      %p200 = por %p198, %p199
      %p201 = scmp.ne.s32.totalorder %s193, %s195
      %p202 = scmp.eq.s32.totalorder %s59, 1
      %p203 = por %p201, %p202
      %p204 = scmp.ne.s32.totalorder %s195, %s196
      %p205 = scmp.eq.s32.totalorder %s59, 0
      %p206 = por %p204, %p205
      %p207 = scmp.ne.s32.totalorder %s195, %s196
      %p208 = scmp.eq.s32.totalorder %s60, 1
      %p209 = por %p207, %p208
      %p211 = scmp.ne.s32.totalorder %s196, %s210
      %p212 = scmp.eq.s32.totalorder %s60, 0
      %p213 = por %p211, %p212
      %s215 = sadd.s32 %s214, 1
      %p218 = scmp.eq.s32.totalorder %s54, 1
      %p219 = scmp.ne.s32.totalorder %s214, %s216
      %p220 = scmp.eq.s32.totalorder %s54, 0
      %p221 = por %p219, %p220
      %p222 = scmp.ne.s32.totalorder %s214, %s216
      %p223 = scmp.eq.s32.totalorder %s59, 1
      %p224 = por %p222, %p223
      %p225 = scmp.ne.s32.totalorder %s216, %s217
      %p226 = scmp.eq.s32.totalorder %s59, 0
      %p227 = por %p225, %p226
      %p228 = scmp.ne.s32.totalorder %s216, %s217
      %p229 = scmp.eq.s32.totalorder %s60, 1
      %p230 = por %p228, %p229
      %p232 = scmp.ne.s32.totalorder %s217, %s231
      %p233 = scmp.eq.s32.totalorder %s60, 0
      %p234 = por %p232, %p233
      %s236 = sadd.s32 %s235, 1
      %p239 = scmp.eq.s32.totalorder %s54, 1
      %p240 = scmp.ne.s32.totalorder %s235, %s237
      %p241 = scmp.eq.s32.totalorder %s54, 0
      %p242 = por %p240, %p241
      %p243 = scmp.ne.s32.totalorder %s235, %s237
      %p244 = scmp.eq.s32.totalorder %s59, 1
      %p245 = por %p243, %p244
      %p246 = scmp.ne.s32.totalorder %s237, %s238
      %p247 = scmp.eq.s32.totalorder %s59, 0
      %p248 = por %p246, %p247
      %p249 = scmp.ne.s32.totalorder %s237, %s238
      %p250 = scmp.eq.s32.totalorder %s60, 1
      %p251 = por %p249, %p250
      %p253 = scmp.ne.s32.totalorder %s238, %s252
      %p254 = scmp.eq.s32.totalorder %s60, 0
      %p255 = por %p253, %p254
      %s257 = sadd.s32 %s256, 1
      %p260 = scmp.eq.s32.totalorder %s54, 1
      %p261 = scmp.ne.s32.totalorder %s256, %s258
      %p262 = scmp.eq.s32.totalorder %s54, 0
      %p263 = por %p261, %p262
      %p264 = scmp.ne.s32.totalorder %s256, %s258
      %p265 = scmp.eq.s32.totalorder %s59, 1
      %p266 = por %p264, %p265
      %p267 = scmp.ne.s32.totalorder %s258, %s259
      %p268 = scmp.eq.s32.totalorder %s59, 0
      %p269 = por %p267, %p268
      %p270 = scmp.ne.s32.totalorder %s258, %s259
      %p271 = scmp.eq.s32.totalorder %s60, 1
      %p272 = por %p270, %p271
      %p274 = scmp.ne.s32.totalorder %s259, %s273
      %p275 = scmp.eq.s32.totalorder %s60, 0
      %p276 = por %p274, %p275
      %s278 = sadd.s32 %s277, 1
      %p281 = scmp.eq.s32.totalorder %s54, 1
      %p282 = scmp.ne.s32.totalorder %s277, %s279
      %p283 = scmp.eq.s32.totalorder %s54, 0
      %p284 = por %p282, %p283
      %p285 = scmp.ne.s32.totalorder %s277, %s279
      %p286 = scmp.eq.s32.totalorder %s59, 1
      %p287 = por %p285, %p286
      %p288 = scmp.ne.s32.totalorder %s279, %s280
      %p289 = scmp.eq.s32.totalorder %s59, 0
      %p290 = por %p288, %p289
      %p291 = scmp.ne.s32.totalorder %s279, %s280
      %p292 = scmp.eq.s32.totalorder %s60, 1
      %p293 = por %p291, %p292
      %p295 = scmp.ne.s32.totalorder %s280, %s294
      %p296 = scmp.eq.s32.totalorder %s60, 0
      %p297 = por %p295, %p296
      %s299 = sadd.s32 %s298, 1
      %p302 = scmp.eq.s32.totalorder %s54, 1
      %p303 = scmp.ne.s32.totalorder %s298, %s300
      %p304 = scmp.eq.s32.totalorder %s54, 0
      %p305 = por %p303, %p304
      %p306 = scmp.ne.s32.totalorder %s298, %s300
      %p307 = scmp.eq.s32.totalorder %s59, 1
      %p308 = por %p306, %p307
      %p309 = scmp.ne.s32.totalorder %s300, %s301
      %p310 = scmp.eq.s32.totalorder %s59, 0
      %p311 = por %p309, %p310
      %p312 = scmp.ne.s32.totalorder %s300, %s301
      %p313 = scmp.eq.s32.totalorder %s60, 1
      %p314 = por %p312, %p313
      %p316 = scmp.ne.s32.totalorder %s301, %s315
      %p317 = scmp.eq.s32.totalorder %s60, 0
      %p318 = por %p316, %p317
      %s320 = sadd.s32 %s319, 1
      %p323 = scmp.eq.s32.totalorder %s54, 1
      %p324 = scmp.ne.s32.totalorder %s319, %s321
      %p325 = scmp.eq.s32.totalorder %s54, 0
      %p326 = por %p324, %p325
      %p327 = scmp.ne.s32.totalorder %s319, %s321
      %p328 = scmp.eq.s32.totalorder %s59, 1
      %p329 = por %p327, %p328
      %p330 = scmp.ne.s32.totalorder %s321, %s322
      %p331 = scmp.eq.s32.totalorder %s59, 0
      %p332 = por %p330, %p331
      %p333 = scmp.ne.s32.totalorder %s321, %s322
      %p334 = scmp.eq.s32.totalorder %s60, 1
      %p335 = por %p333, %p334
      %p337 = scmp.ne.s32.totalorder %s322, %s336
      %p338 = scmp.eq.s32.totalorder %s60, 0
      %p339 = por %p337, %p338
      %s341 = sadd.s32 %s340, 1
      %p344 = scmp.eq.s32.totalorder %s54, 1
      %p345 = scmp.ne.s32.totalorder %s340, %s342
      %p346 = scmp.eq.s32.totalorder %s54, 0
      %p347 = por %p345, %p346
      %p348 = scmp.ne.s32.totalorder %s340, %s342
      %p349 = scmp.eq.s32.totalorder %s59, 1
      %p350 = por %p348, %p349
      %p351 = scmp.ne.s32.totalorder %s342, %s343
      %p352 = scmp.eq.s32.totalorder %s59, 0
      %p353 = por %p351, %p352
      %p354 = scmp.ne.s32.totalorder %s342, %s343
      %p355 = scmp.eq.s32.totalorder %s60, 1
      %p356 = por %p354, %p355
      %p358 = scmp.ne.s32.totalorder %s343, %s357
      %p359 = scmp.eq.s32.totalorder %s60, 0
      %p360 = por %p358, %p359
      %s362 = sadd.s32 %s361, 1
      %p365 = scmp.eq.s32.totalorder %s54, 1
      %p366 = scmp.ne.s32.totalorder %s361, %s363
      %p367 = scmp.eq.s32.totalorder %s54, 0
      %p368 = por %p366, %p367
      %p369 = scmp.ne.s32.totalorder %s361, %s363
      %p370 = scmp.eq.s32.totalorder %s59, 1
      %p371 = por %p369, %p370
      %p372 = scmp.ne.s32.totalorder %s363, %s364
      %p373 = scmp.eq.s32.totalorder %s59, 0
      %p374 = por %p372, %p373
      %p375 = scmp.ne.s32.totalorder %s363, %s364
      %p376 = scmp.eq.s32.totalorder %s60, 1
      %p377 = por %p375, %p376
      %p379 = scmp.ne.s32.totalorder %s364, %s378
      %p380 = scmp.eq.s32.totalorder %s60, 0
      %p381 = por %p379, %p380
      %s383 = sadd.s32 %s382, 1
      %p386 = scmp.eq.s32.totalorder %s54, 1
      %p387 = scmp.ne.s32.totalorder %s382, %s384
      %p388 = scmp.eq.s32.totalorder %s54, 0
      %p389 = por %p387, %p388
      %p390 = scmp.ne.s32.totalorder %s382, %s384
      %p391 = scmp.eq.s32.totalorder %s59, 1
      %p392 = por %p390, %p391
      %p393 = scmp.ne.s32.totalorder %s384, %s385
      %p394 = scmp.eq.s32.totalorder %s59, 0
      %p395 = por %p393, %p394
      %p396 = scmp.ne.s32.totalorder %s384, %s385
      %p397 = scmp.eq.s32.totalorder %s60, 1
      %p398 = por %p396, %p397
      %p400 = scmp.ne.s32.totalorder %s385, %s399
      %p401 = scmp.eq.s32.totalorder %s60, 0
      %p402 = por %p400, %p401
      %s404 = sadd.s32 %s403, 1
      %p407 = scmp.eq.s32.totalorder %s54, 1
      %p408 = scmp.ne.s32.totalorder %s403, %s405
      %p409 = scmp.eq.s32.totalorder %s54, 0
      %p410 = por %p408, %p409
      %p411 = scmp.ne.s32.totalorder %s403, %s405
      %p412 = scmp.eq.s32.totalorder %s59, 1
      %p413 = por %p411, %p412
      %p414 = scmp.ne.s32.totalorder %s405, %s406
      %p415 = scmp.eq.s32.totalorder %s59, 0
      %p416 = por %p414, %p415
      %p417 = scmp.ne.s32.totalorder %s405, %s406
      %p418 = scmp.eq.s32.totalorder %s60, 1
      %p419 = por %p417, %p418
      %p421 = scmp.ne.s32.totalorder %s406, %s420
      %p422 = scmp.eq.s32.totalorder %s60, 0
      %p423 = por %p421, %p422
      %s425 = sadd.s32 %s424, 1
      %p428 = scmp.eq.s32.totalorder %s54, 1
      %p429 = scmp.ne.s32.totalorder %s424, %s426
      %p430 = scmp.eq.s32.totalorder %s54, 0
      %p431 = por %p429, %p430
      %p432 = scmp.ne.s32.totalorder %s424, %s426
      %p433 = scmp.eq.s32.totalorder %s59, 1
      %p434 = por %p432, %p433
      %p435 = scmp.ne.s32.totalorder %s426, %s427
      %p436 = scmp.eq.s32.totalorder %s59, 0
      %p437 = por %p435, %p436
      %p438 = scmp.ne.s32.totalorder %s426, %s427
      %p439 = scmp.eq.s32.totalorder %s60, 1
      %p440 = por %p438, %p439
      %p442 = scmp.ne.s32.totalorder %s427, %s441
      %p443 = scmp.eq.s32.totalorder %s60, 0
      %p444 = por %p442, %p443
      %s446 = sadd.s32 %s445, 1
      %p449 = scmp.eq.s32.totalorder %s54, 1
      %p450 = scmp.ne.s32.totalorder %s445, %s447
      %p451 = scmp.eq.s32.totalorder %s54, 0
      %p452 = por %p450, %p451
      %p453 = scmp.ne.s32.totalorder %s445, %s447
      %p454 = scmp.eq.s32.totalorder %s59, 1
      %p455 = por %p453, %p454
      %p456 = scmp.ne.s32.totalorder %s447, %s448
      %p457 = scmp.eq.s32.totalorder %s59, 0
      %p458 = por %p456, %p457
      %p459 = scmp.ne.s32.totalorder %s447, %s448
      %p460 = scmp.eq.s32.totalorder %s60, 1
      %p461 = por %p459, %p460
      %p463 = scmp.ne.s32.totalorder %s448, %s462
      %p464 = scmp.eq.s32.totalorder %s60, 0
      %p465 = por %p463, %p464
      %s467 = sadd.s32 %s466, 1
      %p470 = scmp.eq.s32.totalorder %s54, 1
      %p471 = scmp.ne.s32.totalorder %s466, %s468
      %p472 = scmp.eq.s32.totalorder %s54, 0
      %p473 = por %p471, %p472
      %p474 = scmp.ne.s32.totalorder %s466, %s468
      %p475 = scmp.eq.s32.totalorder %s59, 1
      %p476 = por %p474, %p475
      %p477 = scmp.ne.s32.totalorder %s468, %s469
      %p478 = scmp.eq.s32.totalorder %s59, 0
      %p479 = por %p477, %p478
      %p480 = scmp.ne.s32.totalorder %s468, %s469
      %p481 = scmp.eq.s32.totalorder %s60, 1
      %p482 = por %p480, %p481
      %p484 = scmp.ne.s32.totalorder %s469, %s483
      %p485 = scmp.eq.s32.totalorder %s60, 0
      %p486 = por %p484, %p485
      %s488 = sadd.s32 %s487, 1
      %p491 = scmp.eq.s32.totalorder %s54, 1
      %p492 = scmp.ne.s32.totalorder %s487, %s489
      %p493 = scmp.eq.s32.totalorder %s54, 0
      %p494 = por %p492, %p493
      %p495 = scmp.ne.s32.totalorder %s487, %s489
      %p496 = scmp.eq.s32.totalorder %s59, 1
      %p497 = por %p495, %p496
      %p498 = scmp.ne.s32.totalorder %s489, %s490
      %p499 = scmp.eq.s32.totalorder %s59, 0
      %p500 = por %p498, %p499
      %p501 = scmp.ne.s32.totalorder %s489, %s490
      %p502 = scmp.eq.s32.totalorder %s60, 1
      %p503 = por %p501, %p502
      %p505 = scmp.ne.s32.totalorder %s490, %s504
      %p506 = scmp.eq.s32.totalorder %s60, 0
      %p507 = por %p505, %p506
      %s509 = sadd.s32 %s508, 1
      %p512 = scmp.eq.s32.totalorder %s54, 1
      %p513 = scmp.ne.s32.totalorder %s508, %s510
      %p514 = scmp.eq.s32.totalorder %s54, 0
      %p515 = por %p513, %p514
      %p516 = scmp.ne.s32.totalorder %s508, %s510
      %p517 = scmp.eq.s32.totalorder %s59, 1
      %p518 = por %p516, %p517
      %p519 = scmp.ne.s32.totalorder %s510, %s511
      %p520 = scmp.eq.s32.totalorder %s59, 0
      %p521 = por %p519, %p520
      %p522 = scmp.ne.s32.totalorder %s510, %s511
      %p523 = scmp.eq.s32.totalorder %s60, 1
      %p524 = por %p522, %p523
      %p526 = scmp.ne.s32.totalorder %s511, %s525
      %p527 = scmp.eq.s32.totalorder %s60, 0
      %p528 = por %p526, %p527
      %s530 = sadd.s32 %s529, 1
      %p533 = scmp.eq.s32.totalorder %s54, 1
      %p534 = scmp.ne.s32.totalorder %s529, %s531
      %p535 = scmp.eq.s32.totalorder %s54, 0
      %p536 = por %p534, %p535
      %p537 = scmp.ne.s32.totalorder %s529, %s531
      %p538 = scmp.eq.s32.totalorder %s59, 1
      %p539 = por %p537, %p538
      %p540 = scmp.ne.s32.totalorder %s531, %s532
      %p541 = scmp.eq.s32.totalorder %s59, 0
      %p542 = por %p540, %p541
      %p543 = scmp.ne.s32.totalorder %s531, %s532
      %p544 = scmp.eq.s32.totalorder %s60, 1
      %p545 = por %p543, %p544
      %p547 = scmp.ne.s32.totalorder %s532, %s546
      %p548 = scmp.eq.s32.totalorder %s60, 0
      %p549 = por %p547, %p548
      %s551 = sadd.s32 %s550, 1
      %p554 = scmp.eq.s32.totalorder %s54, 1
      %p555 = scmp.ne.s32.totalorder %s550, %s552
      %p556 = scmp.eq.s32.totalorder %s54, 0
      %p557 = por %p555, %p556
      %p558 = scmp.ne.s32.totalorder %s550, %s552
      %p559 = scmp.eq.s32.totalorder %s59, 1
      %p560 = por %p558, %p559
      %p561 = scmp.ne.s32.totalorder %s552, %s553
      %p562 = scmp.eq.s32.totalorder %s59, 0
      %p563 = por %p561, %p562
      %p564 = scmp.ne.s32.totalorder %s552, %s553
      %p565 = scmp.eq.s32.totalorder %s60, 1
      %p566 = por %p564, %p565
      %p568 = scmp.ne.s32.totalorder %s553, %s567
      %p569 = scmp.eq.s32.totalorder %s60, 0
      %p570 = por %p568, %p569
      %s572 = sadd.s32 %s571, 1
      %p575 = scmp.eq.s32.totalorder %s54, 1
      %p576 = scmp.ne.s32.totalorder %s571, %s573
      %p577 = scmp.eq.s32.totalorder %s54, 0
      %p578 = por %p576, %p577
      %p579 = scmp.ne.s32.totalorder %s571, %s573
      %p580 = scmp.eq.s32.totalorder %s59, 1
      %p581 = por %p579, %p580
      %p582 = scmp.ne.s32.totalorder %s573, %s574
      %p583 = scmp.eq.s32.totalorder %s59, 0
      %p584 = por %p582, %p583
      %p585 = scmp.ne.s32.totalorder %s573, %s574
      %p586 = scmp.eq.s32.totalorder %s60, 1
      %p587 = por %p585, %p586
      %p589 = scmp.ne.s32.totalorder %s574, %s588
      %p590 = scmp.eq.s32.totalorder %s60, 0
      %p591 = por %p589, %p590
      %s592 = ssub.s32 %s54, %s61
      %p593 = scmp.eq.s32.totalorder %s592, 0
      %s595 = sadd.s32 %s594, 1
      %s596 = scalar_select %p593, %s594, %s595
      %p599 = pneg %p593
      %p600 = scmp.eq.s32.totalorder %s54, 1
      %p601 = por %p599, %p600
      %p602 = scmp.ne.s32.totalorder %s594, %s597
      %p603 = scmp.eq.s32.totalorder %s54, 0
      %p604 = por %p602, %p603
      %p605 = scmp.ne.s32.totalorder %s594, %s597
      %p606 = scmp.eq.s32.totalorder %s59, 1
      %p607 = por %p605, %p606
      %p608 = scmp.ne.s32.totalorder %s597, %s598
      %p609 = scmp.eq.s32.totalorder %s59, 0
      %p610 = por %p608, %p609
      %p611 = scmp.ne.s32.totalorder %s597, %s598
      %p612 = scmp.eq.s32.totalorder %s60, 1
      %p613 = por %p611, %p612
      %p615 = scmp.ne.s32.totalorder %s598, %s614
      %p616 = scmp.eq.s32.totalorder %s60, 0
      %p617 = por %p615, %p616
      %p618 = scmp.le.s32.totalorder 1, %s54
      %p619 = scmp.lt.s32.totalorder %s54, 3
      %p620 = pnand %p618, %p619
      %p621 = pneg %p620
      // Predicated region
      $region9: #{tpu_custom_call.1} parent=5 // pred_check
        _
      $region10: #{tpu_custom_call.1} parent=5 // pred_check_branch
        %623 = sbr.rel (%p620) target = $region12
      $region11: #{tpu_custom_call.1} parent=5 // pred_region
        %s624 = ssub.s32 %s54, 1
        // Predicated region
        $region13: #{tpu_custom_call.1} parent=11 // pred_check
          %p625 = pneg %p101
        $region14: #{tpu_custom_call.1} parent=11 // pred_check_branch
          %627 = sbr.rel (%p625) target = $region16
        $region15: #{tpu_custom_call.1} parent=11 // pred_region
          %s629 = ssub.s32 3072, 3072
          %630 = vsyncadd [#allocation13], %s629
          %s631 = sshll.u32 [#allocation12], 4
          %s632 = int_to_ptr.vmem [resolvable:$true] %s631
          %637 = dma.hbm_to_vmem [thread:$0]  %s1, 3072, %s632, [#allocation13], 384, 384, 24
        $region16: #{tpu_custom_call.1} parent=11 // pred_fallthru
          _
        // Predicated region
        $region17: #{tpu_custom_call.1} parent=11 // pred_check
          %p638 = pneg %p122
        $region18: #{tpu_custom_call.1} parent=11 // pred_check_branch
          %640 = sbr.rel (%p638) target = $region20
        $region19: #{tpu_custom_call.1} parent=11 // pred_region
          _
        $region20: #{tpu_custom_call.1} parent=11 // pred_fallthru
          _
        // Predicated region
        $region21: #{tpu_custom_call.1} parent=11 // pred_check
          %p641 = pneg %p143
        $region22: #{tpu_custom_call.1} parent=11 // pred_check_branch
          %643 = sbr.rel (%p641) target = $region24
        $region23: #{tpu_custom_call.1} parent=11 // pred_region
          %s645 = ssub.s32 6144, 6144
          %646 = vsyncadd [#allocation15], %s645
          %s647 = sshll.u32 [#allocation14], 4
          %s648 = int_to_ptr.vmem [resolvable:$true] %s647
          %653 = dma.hbm_to_vmem [thread:$0]  %s3, 6144, %s648, [#allocation15], 128, 128, 8
        $region24: #{tpu_custom_call.1} parent=11 // pred_fallthru
          _
        // Predicated region
        $region25: #{tpu_custom_call.1} parent=11 // pred_check
          %p654 = pneg %p164
        $region26: #{tpu_custom_call.1} parent=11 // pred_check_branch
          %656 = sbr.rel (%p654) target = $region28
        $region27: #{tpu_custom_call.1} parent=11 // pred_region
          _
        $region28: #{tpu_custom_call.1} parent=11 // pred_fallthru
          _
        // Predicated region
        $region29: #{tpu_custom_call.1} parent=11 // pred_check
          %p657 = pneg %p185
        $region30: #{tpu_custom_call.1} parent=11 // pred_check_branch
          %659 = sbr.rel (%p657) target = $region32
        $region31: #{tpu_custom_call.1} parent=11 // pred_region
          %s661 = ssub.s32 2048, 2048
          %662 = vsyncadd [#allocation15], %s661
          %s663 = sshll.u32 [#allocation16], 4
          %s664 = int_to_ptr.vmem [resolvable:$true] %s663
          %669 = dma.hbm_to_vmem [thread:$0]  %s5, 2048, %s664, [#allocation15], 64, 64, 4
        $region32: #{tpu_custom_call.1} parent=11 // pred_fallthru
          _
        // Predicated region
        $region33: #{tpu_custom_call.1} parent=11 // pred_check
          %p670 = pneg %p206
        $region34: #{tpu_custom_call.1} parent=11 // pred_check_branch
          %672 = sbr.rel (%p670) target = $region36
        $region35: #{tpu_custom_call.1} parent=11 // pred_region
          _
        $region36: #{tpu_custom_call.1} parent=11 // pred_fallthru
          _
        // Predicated region
        $region37: #{tpu_custom_call.1} parent=11 // pred_check
          %p673 = pneg %p227
        $region38: #{tpu_custom_call.1} parent=11 // pred_check_branch
          %675 = sbr.rel (%p673) target = $region40
        $region39: #{tpu_custom_call.1} parent=11 // pred_region
          _
        $region40: #{tpu_custom_call.1} parent=11 // pred_fallthru
          _
        // Predicated region
        $region41: #{tpu_custom_call.1} parent=11 // pred_check
          %p676 = pneg %p248
        $region42: #{tpu_custom_call.1} parent=11 // pred_check_branch
          %678 = sbr.rel (%p676) target = $region44
        $region43: #{tpu_custom_call.1} parent=11 // pred_region
          _
        $region44: #{tpu_custom_call.1} parent=11 // pred_fallthru
          _
        // Predicated region
        $region45: #{tpu_custom_call.1} parent=11 // pred_check
          %p679 = pneg %p269
        $region46: #{tpu_custom_call.1} parent=11 // pred_check_branch
          %681 = sbr.rel (%p679) target = $region48
        $region47: #{tpu_custom_call.1} parent=11 // pred_region
          _
        $region48: #{tpu_custom_call.1} parent=11 // pred_fallthru
          _
        // Predicated region
        $region49: #{tpu_custom_call.1} parent=11 // pred_check
          %p682 = pneg %p290
        $region50: #{tpu_custom_call.1} parent=11 // pred_check_branch
          %684 = sbr.rel (%p682) target = $region52
        $region51: #{tpu_custom_call.1} parent=11 // pred_region
          _
        $region52: #{tpu_custom_call.1} parent=11 // pred_fallthru
          _
        // Predicated region
        $region53: #{tpu_custom_call.1} parent=11 // pred_check
          %p685 = pneg %p311
        $region54: #{tpu_custom_call.1} parent=11 // pred_check_branch
          %687 = sbr.rel (%p685) target = $region56
        $region55: #{tpu_custom_call.1} parent=11 // pred_region
          _
        $region56: #{tpu_custom_call.1} parent=11 // pred_fallthru
          _
        // Predicated region
        $region57: #{tpu_custom_call.1} parent=11 // pred_check
          %p688 = pneg %p332
        $region58: #{tpu_custom_call.1} parent=11 // pred_check_branch
          %690 = sbr.rel (%p688) target = $region60
        $region59: #{tpu_custom_call.1} parent=11 // pred_region
          _
        $region60: #{tpu_custom_call.1} parent=11 // pred_fallthru
          _
        // Predicated region
        $region61: #{tpu_custom_call.1} parent=11 // pred_check
          %p691 = pneg %p353
        $region62: #{tpu_custom_call.1} parent=11 // pred_check_branch
          %693 = sbr.rel (%p691) target = $region64
        $region63: #{tpu_custom_call.1} parent=11 // pred_region
          _
        $region64: #{tpu_custom_call.1} parent=11 // pred_fallthru
          _
        // Predicated region
        $region65: #{tpu_custom_call.1} parent=11 // pred_check
          %p694 = pneg %p374
        $region66: #{tpu_custom_call.1} parent=11 // pred_check_branch
          %696 = sbr.rel (%p694) target = $region68
        $region67: #{tpu_custom_call.1} parent=11 // pred_region
          %s698 = ssub.s32 6144, 6144
          %699 = vsyncadd [#allocation18], %s698
          %s700 = sshll.u32 [#allocation17], 4
          %s701 = int_to_ptr.vmem [resolvable:$true] %s700
          %706 = dma.hbm_to_vmem [thread:$0]  %s14, 6144, %s701, [#allocation18], 128, 128, 8
        $region68: #{tpu_custom_call.1} parent=11 // pred_fallthru
          _
        // Predicated region
        $region69: #{tpu_custom_call.1} parent=11 // pred_check
          %p707 = pneg %p395
        $region70: #{tpu_custom_call.1} parent=11 // pred_check_branch
          %709 = sbr.rel (%p707) target = $region72
        $region71: #{tpu_custom_call.1} parent=11 // pred_region
          _
        $region72: #{tpu_custom_call.1} parent=11 // pred_fallthru
          _
        // Predicated region
        $region73: #{tpu_custom_call.1} parent=11 // pred_check
          %p710 = pneg %p416
        $region74: #{tpu_custom_call.1} parent=11 // pred_check_branch
          %712 = sbr.rel (%p710) target = $region76
        $region75: #{tpu_custom_call.1} parent=11 // pred_region
          %s714 = ssub.s32 2048, 2048
          %715 = vsyncadd [#allocation18], %s714
          %s716 = sshll.u32 [#allocation19], 4
          %s717 = int_to_ptr.vmem [resolvable:$true] %s716
          %722 = dma.hbm_to_vmem [thread:$0]  %s16, 2048, %s717, [#allocation18], 64, 64, 4
        $region76: #{tpu_custom_call.1} parent=11 // pred_fallthru
          _
        // Predicated region
        $region77: #{tpu_custom_call.1} parent=11 // pred_check
          %p723 = pneg %p437
        $region78: #{tpu_custom_call.1} parent=11 // pred_check_branch
          %725 = sbr.rel (%p723) target = $region80
        $region79: #{tpu_custom_call.1} parent=11 // pred_region
          _
        $region80: #{tpu_custom_call.1} parent=11 // pred_fallthru
          _
        // Predicated region
        $region81: #{tpu_custom_call.1} parent=11 // pred_check
          %p726 = pneg %p458
        $region82: #{tpu_custom_call.1} parent=11 // pred_check_branch
          %728 = sbr.rel (%p726) target = $region84
        $region83: #{tpu_custom_call.1} parent=11 // pred_region
          _
        $region84: #{tpu_custom_call.1} parent=11 // pred_fallthru
          _
        // Predicated region
        $region85: #{tpu_custom_call.1} parent=11 // pred_check
          %p729 = pneg %p479
        $region86: #{tpu_custom_call.1} parent=11 // pred_check_branch
          %731 = sbr.rel (%p729) target = $region88
        $region87: #{tpu_custom_call.1} parent=11 // pred_region
          _
        $region88: #{tpu_custom_call.1} parent=11 // pred_fallthru
          _
        // Predicated region
        $region89: #{tpu_custom_call.1} parent=11 // pred_check
          %p732 = pneg %p500
        $region90: #{tpu_custom_call.1} parent=11 // pred_check_branch
          %734 = sbr.rel (%p732) target = $region92
        $region91: #{tpu_custom_call.1} parent=11 // pred_region
          _
        $region92: #{tpu_custom_call.1} parent=11 // pred_fallthru
          _
        // Predicated region
        $region93: #{tpu_custom_call.1} parent=11 // pred_check
          %p735 = pneg %p521
        $region94: #{tpu_custom_call.1} parent=11 // pred_check_branch
          %737 = sbr.rel (%p735) target = $region96
        $region95: #{tpu_custom_call.1} parent=11 // pred_region
          _
        $region96: #{tpu_custom_call.1} parent=11 // pred_fallthru
          _
        // Predicated region
        $region97: #{tpu_custom_call.1} parent=11 // pred_check
          %p738 = pneg %p542
        $region98: #{tpu_custom_call.1} parent=11 // pred_check_branch
          %740 = sbr.rel (%p738) target = $region100
        $region99: #{tpu_custom_call.1} parent=11 // pred_region
          _
        $region100: #{tpu_custom_call.1} parent=11 // pred_fallthru
          _
        // Predicated region
        $region101: #{tpu_custom_call.1} parent=11 // pred_check
          %p741 = pneg %p563
        $region102: #{tpu_custom_call.1} parent=11 // pred_check_branch
          %743 = sbr.rel (%p741) target = $region104
        $region103: #{tpu_custom_call.1} parent=11 // pred_region
          _
        $region104: #{tpu_custom_call.1} parent=11 // pred_fallthru
          _
        // Predicated region
        $region105: #{tpu_custom_call.1} parent=11 // pred_check
          %p744 = pneg %p584
        $region106: #{tpu_custom_call.1} parent=11 // pred_check_branch
          %746 = sbr.rel (%p744) target = $region108
        $region107: #{tpu_custom_call.1} parent=11 // pred_region
          _
        $region108: #{tpu_custom_call.1} parent=11 // pred_fallthru
          _
      $region12: #{tpu_custom_call.1} parent=5 // pred_fallthru
        _
      %p747 = scmp.lt.s32.totalorder %s54, 2
      // Predicated region
      $region109: #{tpu_custom_call.1} parent=5 // pred_check
        %p748 = pneg %p747
      $region110: #{tpu_custom_call.1} parent=5 // pred_check_branch
        %750 = sbr.rel (%p748) target = $region112
      $region111: #{tpu_custom_call.1} parent=5 // pred_region
        // Predicated region
        $region113: #{tpu_custom_call.1} parent=111 // pred_check
          %p751 = pneg %p74
        $region114: #{tpu_custom_call.1} parent=111 // pred_check_branch
          %753 = sbr.rel (%p751) target = $region116
        $region115: #{tpu_custom_call.1} parent=111 // pred_region
          %p754 = scmp.lt.s32.totalorder %s54, 1
          %s755 = scalar_select %p754, %s54, 1
          %s756 = smul.addr %s755, 4
          %s757 = scalar_lea.vmem %s0, %s756
        $region116: #{tpu_custom_call.1} parent=111 // pred_fallthru
          _
      $region112: #{tpu_custom_call.1} parent=5 // pred_fallthru
        _
      %p758 = scmp.le.s32.totalorder 1, %s54
      %p759 = scmp.lt.s32.totalorder %s54, 3
      %p760 = pnand %p758, %p759
      %p761 = pneg %p760
      // Predicated region
      $region117: #{tpu_custom_call.1} parent=5 // pred_check
        _
      $region118: #{tpu_custom_call.1} parent=5 // pred_check_branch
        %763 = sbr.rel (%p760) target = $region120
      $region119: #{tpu_custom_call.1} parent=5 // pred_region
        %s764 = ssub.s32 %s54, 1
        // Predicated region
        $region121: #{tpu_custom_call.1} parent=119 // pred_check
          %p765 = pneg %p101
        $region122: #{tpu_custom_call.1} parent=119 // pred_check_branch
          %767 = sbr.rel (%p765) target = $region124
        $region123: #{tpu_custom_call.1} parent=119 // pred_region
          %768 = dma.done [#allocation13], 3072
        $region124: #{tpu_custom_call.1} parent=119 // pred_fallthru
          _
        // Predicated region
        $region125: #{tpu_custom_call.1} parent=119 // pred_check
          %p769 = pneg %p143
        $region126: #{tpu_custom_call.1} parent=119 // pred_check_branch
          %771 = sbr.rel (%p769) target = $region128
        $region127: #{tpu_custom_call.1} parent=119 // pred_region
          %772 = dma.done [#allocation15], 6144
        $region128: #{tpu_custom_call.1} parent=119 // pred_fallthru
          _
        // Predicated region
        $region129: #{tpu_custom_call.1} parent=119 // pred_check
          %p773 = pneg %p185
        $region130: #{tpu_custom_call.1} parent=119 // pred_check_branch
          %775 = sbr.rel (%p773) target = $region132
        $region131: #{tpu_custom_call.1} parent=119 // pred_region
          %776 = dma.done [#allocation15], 2048
        $region132: #{tpu_custom_call.1} parent=119 // pred_fallthru
          _
        // Predicated region
        $region133: #{tpu_custom_call.1} parent=119 // pred_check
          %p777 = pneg %p374
        $region134: #{tpu_custom_call.1} parent=119 // pred_check_branch
          %779 = sbr.rel (%p777) target = $region136
        $region135: #{tpu_custom_call.1} parent=119 // pred_region
          %780 = dma.done [#allocation18], 6144
        $region136: #{tpu_custom_call.1} parent=119 // pred_fallthru
          _
        // Predicated region
        $region137: #{tpu_custom_call.1} parent=119 // pred_check
          %p781 = pneg %p416
        $region138: #{tpu_custom_call.1} parent=119 // pred_check_branch
          %783 = sbr.rel (%p781) target = $region140
        $region139: #{tpu_custom_call.1} parent=119 // pred_region
          %784 = dma.done [#allocation18], 2048
        $region140: #{tpu_custom_call.1} parent=119 // pred_fallthru
          _
        %p785 = scmp.lt.s32.totalorder %s59, 1
        %s786 = scalar_select %p785, %s59, 1
        %s787 = smul.addr %s786, 4
        %s788 = scalar_lea.vmem %s0, %s787
        %p789 = pneg %p80
        %p790 = pneg %p77
        %p791 = pneg %p101
        %p792 = pneg %p98
        %p793 = pneg %p122
        %p794 = pneg %p119
        %p795 = pneg %p143
        %p796 = pneg %p140
        %p797 = pneg %p164
        %p798 = pneg %p161
        %p799 = pneg %p185
        %p800 = pneg %p182
        %p801 = pneg %p206
        %p802 = pneg %p203
        %p803 = pneg %p227
        %p804 = pneg %p224
        %p805 = pneg %p248
        %p806 = pneg %p245
        %p807 = pneg %p269
        %p808 = pneg %p266
        %p809 = pneg %p290
        %p810 = pneg %p287
        %p811 = pneg %p311
        %p812 = pneg %p308
        %p813 = pneg %p332
        %p814 = pneg %p329
        %p815 = pneg %p353
        %p816 = pneg %p350
        %p817 = pneg %p374
        %p818 = pneg %p371
        %p819 = pneg %p395
        %p820 = pneg %p392
        %p821 = pneg %p416
        %p822 = pneg %p413
        %p823 = pneg %p437
        %p824 = pneg %p434
        %p825 = pneg %p458
        %p826 = pneg %p455
        %p827 = pneg %p479
        %p828 = pneg %p476
        %p829 = pneg %p500
        %p830 = pneg %p497
        %p831 = pneg %p521
        %p832 = pneg %p518
        %p833 = pneg %p542
        %p834 = pneg %p539
        %p835 = pneg %p563
        %p836 = pneg %p560
        %p837 = pneg %p584
        %p838 = pneg %p581
        %p839 = pneg %p610
        %p840 = pneg %p607
        %p841 = scmp.lt.s32.totalorder %s59, 1
        %s842 = scalar_select %p841, %s59, 1
        %s843 = smul.addr %s842, 8
        %s844 = scalar_lea.vmem %s25, %s843
        %p845 = scmp.lt.s32.totalorder %s59, 1
        %s846 = scalar_select %p845, %s59, 1
        %s847 = smul.addr %s846, 4
        %s848 = scalar_lea.vmem %s0, %s847
        %p849 = scmp.lt.s32.totalorder %s59, 1
        %s850 = scalar_select %p849, %s59, 1
        %s851 = smul.addr %s850, 8
        %s852 = scalar_lea.vmem %s25, %s851
        %v854 = vld [vmem:[#allocation14] sm:$0xff]
        %v855 = vld [vmem:[#allocation14 + $0x8] sm:$0xff]
        %v856 = vld [vmem:[#allocation14 + $0x10] sm:$0xff]
        %v857 = vld [vmem:[#allocation14 + $0x18] sm:$0xff]
        %v858 = vld [vmem:[#allocation14 + $0x20] sm:$0xff]
        %v859 = vld [vmem:[#allocation14 + $0x28] sm:$0xff]
        %v860 = vld [vmem:[#allocation14 + $0x30] sm:$0xff]
        %v861 = vld [vmem:[#allocation14 + $0x38] sm:$0xff]
        %v862 = vld [vmem:[#allocation14 + $0x40] sm:$0xff]
        %v863 = vld [vmem:[#allocation14 + $0x48] sm:$0xff]
        %v864 = vld [vmem:[#allocation14 + $0x50] sm:$0xff]
        %v865 = vld [vmem:[#allocation14 + $0x58] sm:$0xff]
        %v866 = vld [vmem:[#allocation14 + $0x60] sm:$0xff]
        %v867 = vld [vmem:[#allocation14 + $0x68] sm:$0xff]
        %v868 = vld [vmem:[#allocation14 + $0x70] sm:$0xff]
        %v869 = vld [vmem:[#allocation14 + $0x78] sm:$0xff]
        %v870 = vld [vmem:[#allocation14 + $0x80] sm:$0xff]
        %v871 = vld [vmem:[#allocation14 + $0x88] sm:$0xff]
        %v872 = vld [vmem:[#allocation14 + $0x90] sm:$0xff]
        %v873 = vld [vmem:[#allocation14 + $0x98] sm:$0xff]
        %v874 = vld [vmem:[#allocation14 + $0xa0] sm:$0xff]
        %v875 = vld [vmem:[#allocation14 + $0xa8] sm:$0xff]
        %v876 = vld [vmem:[#allocation14 + $0xb0] sm:$0xff]
        %v877 = vld [vmem:[#allocation14 + $0xb8] sm:$0xff]
        %v878 = vld [vmem:[#allocation14 + $0xc0] sm:$0xff]
        %v879 = vld [vmem:[#allocation14 + $0xc8] sm:$0xff]
        %v880 = vld [vmem:[#allocation14 + $0xd0] sm:$0xff]
        %v881 = vld [vmem:[#allocation14 + $0xd8] sm:$0xff]
        %v882 = vld [vmem:[#allocation14 + $0xe0] sm:$0xff]
        %v883 = vld [vmem:[#allocation14 + $0xe8] sm:$0xff]
        %v884 = vld [vmem:[#allocation14 + $0xf0] sm:$0xff]
        %v885 = vld [vmem:[#allocation14 + $0xf8] sm:$0xff]
        %v886 = vld [vmem:[#allocation14 + $0x100] sm:$0xff]
        %v887 = vld [vmem:[#allocation14 + $0x108] sm:$0xff]
        %v888 = vld [vmem:[#allocation14 + $0x110] sm:$0xff]
        %v889 = vld [vmem:[#allocation14 + $0x118] sm:$0xff]
        %v890 = vld [vmem:[#allocation14 + $0x120] sm:$0xff]
        %v891 = vld [vmem:[#allocation14 + $0x128] sm:$0xff]
        %v892 = vld [vmem:[#allocation14 + $0x130] sm:$0xff]
        %v893 = vld [vmem:[#allocation14 + $0x138] sm:$0xff]
        %v894 = vld [vmem:[#allocation14 + $0x140] sm:$0xff]
        %v895 = vld [vmem:[#allocation14 + $0x148] sm:$0xff]
        %v896 = vld [vmem:[#allocation14 + $0x150] sm:$0xff]
        %v897 = vld [vmem:[#allocation14 + $0x158] sm:$0xff]
        %v898 = vld [vmem:[#allocation14 + $0x160] sm:$0xff]
        %v899 = vld [vmem:[#allocation14 + $0x168] sm:$0xff]
        %v900 = vld [vmem:[#allocation14 + $0x170] sm:$0xff]
        %v901 = vld [vmem:[#allocation14 + $0x178] sm:$0xff]
        %v902 = vld [vmem:[%s4] sm:$0x3]
        %v903 = vld [vmem:[#allocation16] sm:$0xf]
        %v904 = vld [vmem:[#allocation16 + $0x4] sm:$0xf]
        %v905 = vld [vmem:[#allocation16 + $0x8] sm:$0xf]
        %v906 = vld [vmem:[#allocation16 + $0xc] sm:$0xf]
        %v907 = vld [vmem:[#allocation16 + $0x10] sm:$0xf]
        %v908 = vld [vmem:[#allocation16 + $0x14] sm:$0xf]
        %v909 = vld [vmem:[#allocation16 + $0x18] sm:$0xf]
        %v910 = vld [vmem:[#allocation16 + $0x1c] sm:$0xf]
        %v911 = vld [vmem:[#allocation16 + $0x20] sm:$0xf]
        %v912 = vld [vmem:[#allocation16 + $0x24] sm:$0xf]
        %v913 = vld [vmem:[#allocation16 + $0x28] sm:$0xf]
        %v914 = vld [vmem:[#allocation16 + $0x2c] sm:$0xf]
        %v915 = vld [vmem:[#allocation16 + $0x30] sm:$0xf]
        %v916 = vld [vmem:[#allocation16 + $0x34] sm:$0xf]
        %v917 = vld [vmem:[#allocation16 + $0x38] sm:$0xf]
        %v918 = vld [vmem:[#allocation16 + $0x3c] sm:$0xf]
        %v919 = vld [vmem:[#allocation16 + $0x40] sm:$0xf]
        %v920 = vld [vmem:[#allocation16 + $0x44] sm:$0xf]
        %v921 = vld [vmem:[#allocation16 + $0x48] sm:$0xf]
        %v922 = vld [vmem:[#allocation16 + $0x4c] sm:$0xf]
        %v923 = vld [vmem:[#allocation16 + $0x50] sm:$0xf]
        %v924 = vld [vmem:[#allocation16 + $0x54] sm:$0xf]
        %v925 = vld [vmem:[#allocation16 + $0x58] sm:$0xf]
        %v926 = vld [vmem:[#allocation16 + $0x5c] sm:$0xf]
        %v927 = vld [vmem:[#allocation16 + $0x60] sm:$0xf]
        %v928 = vld [vmem:[#allocation16 + $0x64] sm:$0xf]
        %v929 = vld [vmem:[#allocation16 + $0x68] sm:$0xf]
        %v930 = vld [vmem:[#allocation16 + $0x6c] sm:$0xf]
        %v931 = vld [vmem:[#allocation16 + $0x70] sm:$0xf]
        %v932 = vld [vmem:[#allocation16 + $0x74] sm:$0xf]
        %v933 = vld [vmem:[#allocation16 + $0x78] sm:$0xf]
        %v934 = vld [vmem:[#allocation16 + $0x7c] sm:$0xf]
        %v935 = vld [vmem:[%s6] sm:$0x1]
        %v936 = vld [vmem:[%s7] sm:$0x1]
        %v937 = vld [vmem:[%s8] sm:$0x1]
        %v938 = vld [vmem:[#allocation2] sm:$0x1]
        %v939 = vld [vmem:[#allocation3] sm:$0x1]
        %v940 = vld [vmem:[#allocation4] sm:$0x1]
        %v941 = vld [vmem:[#allocation5] sm:$0x1]
        %v942 = vld [vmem:[#allocation6] sm:$0x1]
        %v943 = vld [vmem:[#allocation17] sm:$0xff]
        %v944 = vld [vmem:[#allocation17 + $0x8] sm:$0xff]
        %v945 = vld [vmem:[#allocation17 + $0x10] sm:$0xff]
        %v946 = vld [vmem:[#allocation17 + $0x18] sm:$0xff]
        %v947 = vld [vmem:[#allocation17 + $0x20] sm:$0xff]
        %v948 = vld [vmem:[#allocation17 + $0x28] sm:$0xff]
        %v949 = vld [vmem:[#allocation17 + $0x30] sm:$0xff]
        %v950 = vld [vmem:[#allocation17 + $0x38] sm:$0xff]
        %v951 = vld [vmem:[#allocation17 + $0x40] sm:$0xff]
        %v952 = vld [vmem:[#allocation17 + $0x48] sm:$0xff]
        %v953 = vld [vmem:[#allocation17 + $0x50] sm:$0xff]
        %v954 = vld [vmem:[#allocation17 + $0x58] sm:$0xff]
        %v955 = vld [vmem:[#allocation17 + $0x60] sm:$0xff]
        %v956 = vld [vmem:[#allocation17 + $0x68] sm:$0xff]
        %v957 = vld [vmem:[#allocation17 + $0x70] sm:$0xff]
        %v958 = vld [vmem:[#allocation17 + $0x78] sm:$0xff]
        %v959 = vld [vmem:[#allocation17 + $0x80] sm:$0xff]
        %v960 = vld [vmem:[#allocation17 + $0x88] sm:$0xff]
        %v961 = vld [vmem:[#allocation17 + $0x90] sm:$0xff]
        %v962 = vld [vmem:[#allocation17 + $0x98] sm:$0xff]
        %v963 = vld [vmem:[#allocation17 + $0xa0] sm:$0xff]
        %v964 = vld [vmem:[#allocation17 + $0xa8] sm:$0xff]
        %v965 = vld [vmem:[#allocation17 + $0xb0] sm:$0xff]
        %v966 = vld [vmem:[#allocation17 + $0xb8] sm:$0xff]
        %v967 = vld [vmem:[#allocation17 + $0xc0] sm:$0xff]
        %v968 = vld [vmem:[#allocation17 + $0xc8] sm:$0xff]
        %v969 = vld [vmem:[#allocation17 + $0xd0] sm:$0xff]
        %v970 = vld [vmem:[#allocation17 + $0xd8] sm:$0xff]
        %v971 = vld [vmem:[#allocation17 + $0xe0] sm:$0xff]
        %v972 = vld [vmem:[#allocation17 + $0xe8] sm:$0xff]
        %v973 = vld [vmem:[#allocation17 + $0xf0] sm:$0xff]
        %v974 = vld [vmem:[#allocation17 + $0xf8] sm:$0xff]
        %v975 = vld [vmem:[#allocation17 + $0x100] sm:$0xff]
        %v976 = vld [vmem:[#allocation17 + $0x108] sm:$0xff]
        %v977 = vld [vmem:[#allocation17 + $0x110] sm:$0xff]
        %v978 = vld [vmem:[#allocation17 + $0x118] sm:$0xff]
        %v979 = vld [vmem:[#allocation17 + $0x120] sm:$0xff]
        %v980 = vld [vmem:[#allocation17 + $0x128] sm:$0xff]
        %v981 = vld [vmem:[#allocation17 + $0x130] sm:$0xff]
        %v982 = vld [vmem:[#allocation17 + $0x138] sm:$0xff]
        %v983 = vld [vmem:[#allocation17 + $0x140] sm:$0xff]
        %v984 = vld [vmem:[#allocation17 + $0x148] sm:$0xff]
        %v985 = vld [vmem:[#allocation17 + $0x150] sm:$0xff]
        %v986 = vld [vmem:[#allocation17 + $0x158] sm:$0xff]
        %v987 = vld [vmem:[#allocation17 + $0x160] sm:$0xff]
        %v988 = vld [vmem:[#allocation17 + $0x168] sm:$0xff]
        %v989 = vld [vmem:[#allocation17 + $0x170] sm:$0xff]
        %v990 = vld [vmem:[#allocation17 + $0x178] sm:$0xff]
        %v991 = vld [vmem:[%s15] sm:$0x3]
        %v992 = vld [vmem:[#allocation19] sm:$0xf]
        %v993 = vld [vmem:[#allocation19 + $0x4] sm:$0xf]
        %v994 = vld [vmem:[#allocation19 + $0x8] sm:$0xf]
        %v995 = vld [vmem:[#allocation19 + $0xc] sm:$0xf]
        %v996 = vld [vmem:[#allocation19 + $0x10] sm:$0xf]
        %v997 = vld [vmem:[#allocation19 + $0x14] sm:$0xf]
        %v998 = vld [vmem:[#allocation19 + $0x18] sm:$0xf]
        %v999 = vld [vmem:[#allocation19 + $0x1c] sm:$0xf]
        %v1000 = vld [vmem:[#allocation19 + $0x20] sm:$0xf]
        %v1001 = vld [vmem:[#allocation19 + $0x24] sm:$0xf]
        %v1002 = vld [vmem:[#allocation19 + $0x28] sm:$0xf]
        %v1003 = vld [vmem:[#allocation19 + $0x2c] sm:$0xf]
        %v1004 = vld [vmem:[#allocation19 + $0x30] sm:$0xf]
        %v1005 = vld [vmem:[#allocation19 + $0x34] sm:$0xf]
        %v1006 = vld [vmem:[#allocation19 + $0x38] sm:$0xf]
        %v1007 = vld [vmem:[#allocation19 + $0x3c] sm:$0xf]
        %v1008 = vld [vmem:[#allocation19 + $0x40] sm:$0xf]
        %v1009 = vld [vmem:[#allocation19 + $0x44] sm:$0xf]
        %v1010 = vld [vmem:[#allocation19 + $0x48] sm:$0xf]
        %v1011 = vld [vmem:[#allocation19 + $0x4c] sm:$0xf]
        %v1012 = vld [vmem:[#allocation19 + $0x50] sm:$0xf]
        %v1013 = vld [vmem:[#allocation19 + $0x54] sm:$0xf]
        %v1014 = vld [vmem:[#allocation19 + $0x58] sm:$0xf]
        %v1015 = vld [vmem:[#allocation19 + $0x5c] sm:$0xf]
        %v1016 = vld [vmem:[#allocation19 + $0x60] sm:$0xf]
        %v1017 = vld [vmem:[#allocation19 + $0x64] sm:$0xf]
        %v1018 = vld [vmem:[#allocation19 + $0x68] sm:$0xf]
        %v1019 = vld [vmem:[#allocation19 + $0x6c] sm:$0xf]
        %v1020 = vld [vmem:[#allocation19 + $0x70] sm:$0xf]
        %v1021 = vld [vmem:[#allocation19 + $0x74] sm:$0xf]
        %v1022 = vld [vmem:[#allocation19 + $0x78] sm:$0xf]
        %v1023 = vld [vmem:[#allocation19 + $0x7c] sm:$0xf]
        %v1024 = vld [vmem:[%s17] sm:$0x1]
        %v1025 = vld [vmem:[%s18] sm:$0x1]
        %v1026 = vld [vmem:[%s19] sm:$0x1]
        %v1027 = vld [vmem:[#allocation7] sm:$0x1]
        %v1028 = vld [vmem:[#allocation8] sm:$0x1]
        %v1029 = vld [vmem:[#allocation9] sm:$0x1]
        %v1030 = vld [vmem:[#allocation10] sm:$0x1]
        %v1031 = vld [vmem:[#allocation11] sm:$0x1]
        %v1032 = vld [vmem:[%s848] sm:$0xf]
        %v1033 = vld [vmem:[#allocation12] sm:$0xff]
        %v1034 = vld [vmem:[#allocation12 + $0x8] sm:$0xff]
        %v1035 = vld [vmem:[#allocation12 + $0x10] sm:$0xff]
        %v1036 = vld [vmem:[#allocation12 + $0x18] sm:$0xff]
        %v1037 = vld [vmem:[#allocation12 + $0x20] sm:$0xff]
        %v1038 = vld [vmem:[#allocation12 + $0x28] sm:$0xff]
        %v1039 = vld [vmem:[#allocation12 + $0x30] sm:$0xff]
        %v1040 = vld [vmem:[#allocation12 + $0x38] sm:$0xff]
        %v1041 = vld [vmem:[#allocation12 + $0x40] sm:$0xff]
        %v1042 = vld [vmem:[#allocation12 + $0x48] sm:$0xff]
        %v1043 = vld [vmem:[#allocation12 + $0x50] sm:$0xff]
        %v1044 = vld [vmem:[#allocation12 + $0x58] sm:$0xff]
        %v1045 = vld [vmem:[#allocation12 + $0x60] sm:$0xff]
        %v1046 = vld [vmem:[#allocation12 + $0x68] sm:$0xff]
        %v1047 = vld [vmem:[#allocation12 + $0x70] sm:$0xff]
        %v1048 = vld [vmem:[#allocation12 + $0x78] sm:$0xff]
        %v1049 = vld [vmem:[#allocation12 + $0x80] sm:$0xff]
        %v1050 = vld [vmem:[#allocation12 + $0x88] sm:$0xff]
        %v1051 = vld [vmem:[#allocation12 + $0x90] sm:$0xff]
        %v1052 = vld [vmem:[#allocation12 + $0x98] sm:$0xff]
        %v1053 = vld [vmem:[#allocation12 + $0xa0] sm:$0xff]
        %v1054 = vld [vmem:[#allocation12 + $0xa8] sm:$0xff]
        %v1055 = vld [vmem:[#allocation12 + $0xb0] sm:$0xff]
        %v1056 = vld [vmem:[#allocation12 + $0xb8] sm:$0xff]
        %v1057 = vld [vmem:[%s2] sm:$0x3f]
        %v1059 = vlaneseq
        %v1060 = vshrl.u32 %v1059, 7
        %v1061 = vsub.s32 0, %v1060
        %v1062 = vrot.slane %v1057, %v1061
        %v1063 = vlaneseq
        %v1064 = vshrl.u32 %v1063, 7
        %v1065 = vsub.s32 1, %v1064
        %v1066 = vrot.slane %v1057, %v1065
        %v1067 = vlaneseq
        %v1068 = vshrl.u32 %v1067, 7
        %v1069 = vsub.s32 2, %v1068
        %v1070 = vrot.slane %v1057, %v1069
        %v1071 = vlaneseq
        %v1072 = vshrl.u32 %v1071, 7
        %v1073 = vsub.s32 3, %v1072
        %v1074 = vrot.slane %v1057, %v1073
        %v1075 = vlaneseq
        %v1076 = vshrl.u32 %v1075, 7
        %v1077 = vsub.s32 4, %v1076
        %v1078 = vrot.slane %v1057, %v1077
        %v1079 = vlaneseq
        %v1080 = vshrl.u32 %v1079, 7
        %v1081 = vsub.s32 5, %v1080
        %v1082 = vrot.slane %v1057, %v1081
        %v1113 = vunpack.c.l.b16 %v1033
        %v1114 = vunpack.c.h.b16 %v1033
        %v1115 = vunpack.c.l.b16 %v1034
        %v1116 = vunpack.c.h.b16 %v1034
        %v1117 = vunpack.c.l.b16 %v1035
        %v1118 = vunpack.c.h.b16 %v1035
        %v1119 = vunpack.c.l.b16 %v1036
        %v1120 = vunpack.c.h.b16 %v1036
        %v1121 = vunpack.c.l.b16 %v1037
        %v1122 = vunpack.c.h.b16 %v1037
        %v1123 = vunpack.c.l.b16 %v1038
        %v1124 = vunpack.c.h.b16 %v1038
        %v1125 = vunpack.c.l.b16 %v1039
        %v1126 = vunpack.c.h.b16 %v1039
        %v1127 = vunpack.c.l.b16 %v1040
        %v1128 = vunpack.c.h.b16 %v1040
        %v1129 = vunpack.c.l.b16 %v1041
        %v1130 = vunpack.c.h.b16 %v1041
        %v1131 = vunpack.c.l.b16 %v1042
        %v1132 = vunpack.c.h.b16 %v1042
        %v1133 = vunpack.c.l.b16 %v1043
        %v1134 = vunpack.c.h.b16 %v1043
        %v1135 = vunpack.c.l.b16 %v1044
        %v1136 = vunpack.c.h.b16 %v1044
        %v1137 = vunpack.c.l.b16 %v1045
        %v1138 = vunpack.c.h.b16 %v1045
        %v1139 = vunpack.c.l.b16 %v1046
        %v1140 = vunpack.c.h.b16 %v1046
        %v1141 = vunpack.c.l.b16 %v1047
        %v1142 = vunpack.c.h.b16 %v1047
        %v1143 = vunpack.c.l.b16 %v1048
        %v1144 = vunpack.c.h.b16 %v1048
        %v1145 = vunpack.c.l.b16 %v1049
        %v1146 = vunpack.c.h.b16 %v1049
        %v1147 = vunpack.c.l.b16 %v1050
        %v1148 = vunpack.c.h.b16 %v1050
        %v1149 = vunpack.c.l.b16 %v1051
        %v1150 = vunpack.c.h.b16 %v1051
        %v1151 = vunpack.c.l.b16 %v1052
        %v1152 = vunpack.c.h.b16 %v1052
        %v1153 = vunpack.c.l.b16 %v1053
        %v1154 = vunpack.c.h.b16 %v1053
        %v1155 = vunpack.c.l.b16 %v1054
        %v1156 = vunpack.c.h.b16 %v1054
        %v1157 = vunpack.c.l.b16 %v1055
        %v1158 = vunpack.c.h.b16 %v1055
        %v1159 = vunpack.c.l.b16 %v1056
        %v1160 = vunpack.c.h.b16 %v1056
        %v1161 = vpack.c.b16 %v1119, %v1113
        %v1162 = vpack.c.b16 %v1120, %v1114
        %v1163 = vpack.c.b16 %v1121, %v1115
        %v1164 = vpack.c.b16 %v1122, %v1116
        %v1165 = vpack.c.b16 %v1123, %v1117
        %v1166 = vpack.c.b16 %v1124, %v1118
        %v1167 = vpack.c.b16 %v1131, %v1125
        %v1168 = vpack.c.b16 %v1132, %v1126
        %v1169 = vpack.c.b16 %v1133, %v1127
        %v1170 = vpack.c.b16 %v1134, %v1128
        %v1171 = vpack.c.b16 %v1135, %v1129
        %v1172 = vpack.c.b16 %v1136, %v1130
        %v1173 = vpack.c.b16 %v1143, %v1137
        %v1174 = vpack.c.b16 %v1144, %v1138
        %v1175 = vpack.c.b16 %v1145, %v1139
        %v1176 = vpack.c.b16 %v1146, %v1140
        %v1177 = vpack.c.b16 %v1147, %v1141
        %v1178 = vpack.c.b16 %v1148, %v1142
        %v1179 = vpack.c.b16 %v1155, %v1149
        %v1180 = vpack.c.b16 %v1156, %v1150
        %v1181 = vpack.c.b16 %v1157, %v1151
        %v1182 = vpack.c.b16 %v1158, %v1152
        %v1183 = vpack.c.b16 %v1159, %v1153
        %v1184 = vpack.c.b16 %v1160, %v1154
        %vm1209 = vcmask 523264
        %v1211 = vsel %vm1209, %v1032, 0
        %1213 = vmatprep.subr.bf16.mxu0 0
        %1214 = vmatpush1.bf16.msra.mxu0 0
        %1215 = vmatprep.subr.bf16.mxu0 0
        %1216 = vmatpush1.bf16.msra.mxu0 0
        %1217 = vmatprep.subr.bf16.mxu0 0
        %1218 = vmatpush1.bf16.msra.mxu0 0
        %1219 = vmatprep.subr.bf16.mxu0 0
        %1220 = vmatpush1.bf16.msra.mxu0 0
        %1221 = vmatprep.subr.bf16.mxu0 %v1180
        %1222 = vmatpush1.bf16.msra.mxu0 %v1179
        %1223 = vmatprep.subr.bf16.mxu0 %v1174
        %1224 = vmatpush1.bf16.msra.mxu0 %v1173
        %1225 = vmatprep.subr.bf16.mxu0 %v1168
        %1226 = vmatpush1.bf16.msra.mxu0 %v1167
        %1227 = vmatprep.subr.bf16.mxu0 %v1162
        %1228 = vmatpush1.bf16.msra.mxu0 %v1161
        %1229 = vmatprep.subr.bf16.mxu0 0
        %1230 = vmatpush2.bf16.msra.mxu0 0
        %1231 = vmatprep.subr.bf16.mxu0 0
        %1232 = vmatpush2.bf16.msra.mxu0 0
        %1233 = vmatprep.subr.bf16.mxu0 0
        %1234 = vmatpush2.bf16.msra.mxu0 0
        %1235 = vmatprep.subr.bf16.mxu0 0
        %1236 = vmatpush2.bf16.msra.mxu0 0
        %1237 = vmatprep.subr.bf16.mxu0 0
        %1238 = vmatpush2.bf16.msra.mxu0 0
        %1239 = vmatprep.subr.bf16.mxu0 0
        %1240 = vmatpush2.bf16.msra.mxu0 0
        %1241 = vmatprep.subr.bf16.mxu0 0
        %1242 = vmatpush2.bf16.msra.mxu0 0
        %1243 = vmatprep.subr.bf16.mxu0 0
        %1244 = vmatpush2.bf16.msra.mxu0 0
        %1245 = vmatprep.mubr.bf16.mxu0 0
        %1246 = vmatmul.mubr.bf16.gmra.mxu0 %v1211
        %v1247 = vpop.f32.mrf.mxu0
        %v1248 = vadd.f32 %v1062, %v1247
        %v1249 = vpop.f32.mrf.mxu0
        %v1250 = vadd.f32 %v1066, %v1249
        %v1251 = vpop.f32.mrf.mxu0
        %v1252 = vpop.f32.mrf.mxu0
        %1253 = vdwg.mxu0
        %1254 = vmatprep.subr.bf16.mxu0 0
        %1255 = vmatpush1.bf16.msra.mxu0 0
        %1256 = vmatprep.subr.bf16.mxu0 0
        %1257 = vmatpush1.bf16.msra.mxu0 0
        %1258 = vmatprep.subr.bf16.mxu0 0
        %1259 = vmatpush1.bf16.msra.mxu0 0
        %1260 = vmatprep.subr.bf16.mxu0 0
        %1261 = vmatpush1.bf16.msra.mxu0 0
        %1262 = vmatprep.subr.bf16.mxu0 %v1182
        %1263 = vmatpush1.bf16.msra.mxu0 %v1181
        %1264 = vmatprep.subr.bf16.mxu0 %v1176
        %1265 = vmatpush1.bf16.msra.mxu0 %v1175
        %1266 = vmatprep.subr.bf16.mxu0 %v1170
        %1267 = vmatpush1.bf16.msra.mxu0 %v1169
        %1268 = vmatprep.subr.bf16.mxu0 %v1164
        %1269 = vmatpush1.bf16.msra.mxu0 %v1163
        %1270 = vmatprep.subr.bf16.mxu0 0
        %1271 = vmatpush2.bf16.msra.mxu0 0
        %1272 = vmatprep.subr.bf16.mxu0 0
        %1273 = vmatpush2.bf16.msra.mxu0 0
        %1274 = vmatprep.subr.bf16.mxu0 0
        %1275 = vmatpush2.bf16.msra.mxu0 0
        %1276 = vmatprep.subr.bf16.mxu0 0
        %1277 = vmatpush2.bf16.msra.mxu0 0
        %1278 = vmatprep.subr.bf16.mxu0 0
        %1279 = vmatpush2.bf16.msra.mxu0 0
        %1280 = vmatprep.subr.bf16.mxu0 0
        %1281 = vmatpush2.bf16.msra.mxu0 0
        %1282 = vmatprep.subr.bf16.mxu0 0
        %1283 = vmatpush2.bf16.msra.mxu0 0
        %1284 = vmatprep.subr.bf16.mxu0 0
        %1285 = vmatpush2.bf16.msra.mxu0 0
        %1286 = vmatprep.mubr.bf16.mxu0 0
        %1287 = vmatmul.mubr.bf16.gmra.mxu0 %v1211
        %v1288 = vpop.f32.mrf.mxu0
        %v1289 = vadd.f32 %v1070, %v1288
        %v1290 = vpop.f32.mrf.mxu0
        %v1291 = vadd.f32 %v1074, %v1290
        %v1292 = vpop.f32.mrf.mxu0
        %v1293 = vpop.f32.mrf.mxu0
        %1294 = vdwg.mxu0
        %1295 = vmatprep.subr.bf16.mxu0 0
        %1296 = vmatpush1.bf16.msra.mxu0 0
        %1297 = vmatprep.subr.bf16.mxu0 0
        %1298 = vmatpush1.bf16.msra.mxu0 0
        %1299 = vmatprep.subr.bf16.mxu0 0
        %1300 = vmatpush1.bf16.msra.mxu0 0
        %1301 = vmatprep.subr.bf16.mxu0 0
        %1302 = vmatpush1.bf16.msra.mxu0 0
        %1303 = vmatprep.subr.bf16.mxu0 %v1184
        %1304 = vmatpush1.bf16.msra.mxu0 %v1183
        %1305 = vmatprep.subr.bf16.mxu0 %v1178
        %1306 = vmatpush1.bf16.msra.mxu0 %v1177
        %1307 = vmatprep.subr.bf16.mxu0 %v1172
        %1308 = vmatpush1.bf16.msra.mxu0 %v1171
        %1309 = vmatprep.subr.bf16.mxu0 %v1166
        %1310 = vmatpush1.bf16.msra.mxu0 %v1165
        %1311 = vmatprep.subr.bf16.mxu0 0
        %1312 = vmatpush2.bf16.msra.mxu0 0
        %1313 = vmatprep.subr.bf16.mxu0 0
        %1314 = vmatpush2.bf16.msra.mxu0 0
        %1315 = vmatprep.subr.bf16.mxu0 0
        %1316 = vmatpush2.bf16.msra.mxu0 0
        %1317 = vmatprep.subr.bf16.mxu0 0
        %1318 = vmatpush2.bf16.msra.mxu0 0
        %1319 = vmatprep.subr.bf16.mxu0 0
        %1320 = vmatpush2.bf16.msra.mxu0 0
        %1321 = vmatprep.subr.bf16.mxu0 0
        %1322 = vmatpush2.bf16.msra.mxu0 0
        %1323 = vmatprep.subr.bf16.mxu0 0
        %1324 = vmatpush2.bf16.msra.mxu0 0
        %1325 = vmatprep.subr.bf16.mxu0 0
        %1326 = vmatpush2.bf16.msra.mxu0 0
        %1327 = vmatprep.mubr.bf16.mxu0 0
        %1328 = vmatmul.mubr.bf16.gmra.mxu0 %v1211
        %v1329 = vpop.f32.mrf.mxu0
        %v1330 = vadd.f32 %v1078, %v1329
        %v1331 = vpop.f32.mrf.mxu0
        %v1332 = vadd.f32 %v1082, %v1331
        %v1333 = vpop.f32.mrf.mxu0
        %v1334 = vpop.f32.mrf.mxu0
        %1335 = vdwg.mxu0
        %v1336 = vmax.f32 %v1248, 0.0
        %v1337 = vmax.f32 %v1250, 0.0
        %v1338 = vmax.f32 %v1289, 0.0
        %v1339 = vmax.f32 %v1291, 0.0
        %v1340 = vmax.f32 %v1330, 0.0
        %v1341 = vmax.f32 %v1332, 0.0
        %v1342 = vpack.c.bf16 %v1336, %v1336
        %v1343 = vpack.c.bf16 %v1337, %v1337
        %v1344 = vpack.c.bf16 %v1338, %v1338
        %v1346 = vlaneseq
        %v1347 = vshrl.u32 %v1346, 7
        %v1348 = vsub.s32 0, %v1347
        %v1349 = vrot.slane %v902, %v1348
        %v1350 = vlaneseq
        %v1351 = vshrl.u32 %v1350, 7
        %v1352 = vsub.s32 1, %v1351
        %v1353 = vrot.slane %v902, %v1352
        %v1404 = vunpack.c.l.b16 %v854
        %v1405 = vunpack.c.h.b16 %v854
        %v1406 = vunpack.c.l.b16 %v855
        %v1407 = vunpack.c.h.b16 %v855
        %v1408 = vunpack.c.l.b16 %v856
        %v1409 = vunpack.c.h.b16 %v856
        %v1410 = vunpack.c.l.b16 %v857
        %v1411 = vunpack.c.h.b16 %v857
        %v1412 = vunpack.c.l.b16 %v858
        %v1413 = vunpack.c.h.b16 %v858
        %v1414 = vunpack.c.l.b16 %v859
        %v1415 = vunpack.c.h.b16 %v859
        %v1416 = vunpack.c.l.b16 %v860
        %v1417 = vunpack.c.h.b16 %v860
        %v1418 = vunpack.c.l.b16 %v861
        %v1419 = vunpack.c.h.b16 %v861
        %v1420 = vunpack.c.l.b16 %v862
        %v1421 = vunpack.c.h.b16 %v862
        %v1422 = vunpack.c.l.b16 %v863
        %v1423 = vunpack.c.h.b16 %v863
        %v1424 = vunpack.c.l.b16 %v864
        %v1425 = vunpack.c.h.b16 %v864
        %v1426 = vunpack.c.l.b16 %v865
        %v1427 = vunpack.c.h.b16 %v865
        %v1428 = vunpack.c.l.b16 %v866
        %v1429 = vunpack.c.h.b16 %v866
        %v1430 = vunpack.c.l.b16 %v867
        %v1431 = vunpack.c.h.b16 %v867
        %v1432 = vunpack.c.l.b16 %v868
        %v1433 = vunpack.c.h.b16 %v868
        %v1434 = vunpack.c.l.b16 %v869
        %v1435 = vunpack.c.h.b16 %v869
        %v1436 = vunpack.c.l.b16 %v870
        %v1437 = vunpack.c.h.b16 %v870
        %v1438 = vunpack.c.l.b16 %v871
        %v1439 = vunpack.c.h.b16 %v871
        %v1440 = vunpack.c.l.b16 %v872
        %v1441 = vunpack.c.h.b16 %v872
        %v1442 = vunpack.c.l.b16 %v873
        %v1443 = vunpack.c.h.b16 %v873
        %v1444 = vunpack.c.l.b16 %v874
        %v1445 = vunpack.c.h.b16 %v874
        %v1446 = vunpack.c.l.b16 %v875
        %v1447 = vunpack.c.h.b16 %v875
        %v1448 = vunpack.c.l.b16 %v876
        %v1449 = vunpack.c.h.b16 %v876
        %v1450 = vunpack.c.l.b16 %v877
        %v1451 = vunpack.c.h.b16 %v877
        %v1452 = vunpack.c.l.b16 %v878
        %v1453 = vunpack.c.h.b16 %v878
        %v1454 = vunpack.c.l.b16 %v879
        %v1455 = vunpack.c.h.b16 %v879
        %v1456 = vunpack.c.l.b16 %v880
        %v1457 = vunpack.c.h.b16 %v880
        %v1458 = vunpack.c.l.b16 %v881
        %v1459 = vunpack.c.h.b16 %v881
        %v1460 = vunpack.c.l.b16 %v882
        %v1461 = vunpack.c.h.b16 %v882
        %v1462 = vunpack.c.l.b16 %v883
        %v1463 = vunpack.c.h.b16 %v883
        %v1464 = vunpack.c.l.b16 %v884
        %v1465 = vunpack.c.h.b16 %v884
        %v1466 = vunpack.c.l.b16 %v885
        %v1467 = vunpack.c.h.b16 %v885
        %v1468 = vunpack.c.l.b16 %v886
        %v1469 = vunpack.c.h.b16 %v886
        %v1470 = vunpack.c.l.b16 %v887
        %v1471 = vunpack.c.h.b16 %v887
        %v1472 = vunpack.c.l.b16 %v888
        %v1473 = vunpack.c.h.b16 %v888
        %v1474 = vunpack.c.l.b16 %v889
        %v1475 = vunpack.c.h.b16 %v889
        %v1476 = vunpack.c.l.b16 %v890
        %v1477 = vunpack.c.h.b16 %v890
        %v1478 = vunpack.c.l.b16 %v891
        %v1479 = vunpack.c.h.b16 %v891
        %v1480 = vunpack.c.l.b16 %v892
        %v1481 = vunpack.c.h.b16 %v892
        %v1482 = vunpack.c.l.b16 %v893
        %v1483 = vunpack.c.h.b16 %v893
        %v1484 = vunpack.c.l.b16 %v894
        %v1485 = vunpack.c.h.b16 %v894
        %v1486 = vunpack.c.l.b16 %v895
        %v1487 = vunpack.c.h.b16 %v895
        %v1488 = vunpack.c.l.b16 %v896
        %v1489 = vunpack.c.h.b16 %v896
        %v1490 = vunpack.c.l.b16 %v897
        %v1491 = vunpack.c.h.b16 %v897
        %v1492 = vunpack.c.l.b16 %v898
        %v1493 = vunpack.c.h.b16 %v898
        %v1494 = vunpack.c.l.b16 %v899
        %v1495 = vunpack.c.h.b16 %v899
        %v1496 = vunpack.c.l.b16 %v900
        %v1497 = vunpack.c.h.b16 %v900
        %v1498 = vunpack.c.l.b16 %v901
        %v1499 = vunpack.c.h.b16 %v901
        %v1500 = vpack.c.b16 %v1406, %v1404
        %v1501 = vpack.c.b16 %v1407, %v1405
        %v1502 = vpack.c.b16 %v1410, %v1408
        %v1503 = vpack.c.b16 %v1411, %v1409
        %v1504 = vpack.c.b16 %v1414, %v1412
        %v1505 = vpack.c.b16 %v1415, %v1413
        %v1506 = vpack.c.b16 %v1418, %v1416
        %v1507 = vpack.c.b16 %v1419, %v1417
        %v1508 = vpack.c.b16 %v1422, %v1420
        %v1509 = vpack.c.b16 %v1423, %v1421
        %v1510 = vpack.c.b16 %v1426, %v1424
        %v1511 = vpack.c.b16 %v1427, %v1425
        %v1512 = vpack.c.b16 %v1430, %v1428
        %v1513 = vpack.c.b16 %v1431, %v1429
        %v1514 = vpack.c.b16 %v1434, %v1432
        %v1515 = vpack.c.b16 %v1435, %v1433
        %v1516 = vpack.c.b16 %v1438, %v1436
        %v1517 = vpack.c.b16 %v1439, %v1437
        %v1518 = vpack.c.b16 %v1442, %v1440
        %v1519 = vpack.c.b16 %v1443, %v1441
        %v1520 = vpack.c.b16 %v1446, %v1444
        %v1521 = vpack.c.b16 %v1447, %v1445
        %v1522 = vpack.c.b16 %v1450, %v1448
        %v1523 = vpack.c.b16 %v1451, %v1449
        %v1524 = vpack.c.b16 %v1454, %v1452
        %v1525 = vpack.c.b16 %v1455, %v1453
        %v1526 = vpack.c.b16 %v1458, %v1456
        %v1527 = vpack.c.b16 %v1459, %v1457
        %v1528 = vpack.c.b16 %v1462, %v1460
        %v1529 = vpack.c.b16 %v1463, %v1461
        %v1530 = vpack.c.b16 %v1466, %v1464
        %v1531 = vpack.c.b16 %v1467, %v1465
        %v1532 = vpack.c.b16 %v1470, %v1468
        %v1533 = vpack.c.b16 %v1471, %v1469
        %v1534 = vpack.c.b16 %v1474, %v1472
        %v1535 = vpack.c.b16 %v1475, %v1473
        %v1536 = vpack.c.b16 %v1478, %v1476
        %v1537 = vpack.c.b16 %v1479, %v1477
        %v1538 = vpack.c.b16 %v1482, %v1480
        %v1539 = vpack.c.b16 %v1483, %v1481
        %v1540 = vpack.c.b16 %v1486, %v1484
        %v1541 = vpack.c.b16 %v1487, %v1485
        %v1542 = vpack.c.b16 %v1490, %v1488
        %v1543 = vpack.c.b16 %v1491, %v1489
        %v1544 = vpack.c.b16 %v1494, %v1492
        %v1545 = vpack.c.b16 %v1495, %v1493
        %v1546 = vpack.c.b16 %v1498, %v1496
        %v1547 = vpack.c.b16 %v1499, %v1497
        %1596 = vmatprep.subr.bf16.mxu0 %v1515
        %1597 = vmatpush1.bf16.msra.mxu0 %v1514
        %1598 = vmatprep.subr.bf16.mxu0 %v1513
        %1599 = vmatpush1.bf16.msra.mxu0 %v1512
        %1600 = vmatprep.subr.bf16.mxu0 %v1511
        %1601 = vmatpush1.bf16.msra.mxu0 %v1510
        %1602 = vmatprep.subr.bf16.mxu0 %v1509
        %1603 = vmatpush1.bf16.msra.mxu0 %v1508
        %1604 = vmatprep.subr.bf16.mxu0 %v1507
        %1605 = vmatpush1.bf16.msra.mxu0 %v1506
        %1606 = vmatprep.subr.bf16.mxu0 %v1505
        %1607 = vmatpush1.bf16.msra.mxu0 %v1504
        %1608 = vmatprep.subr.bf16.mxu0 %v1503
        %1609 = vmatpush1.bf16.msra.mxu0 %v1502
        %1610 = vmatprep.subr.bf16.mxu0 %v1501
        %1611 = vmatpush1.bf16.msra.mxu0 %v1500
        %1612 = vmatprep.subr.bf16.mxu0 %v1531
        %1613 = vmatpush2.bf16.msra.mxu0 %v1530
        %1614 = vmatprep.subr.bf16.mxu0 %v1529
        %1615 = vmatpush2.bf16.msra.mxu0 %v1528
        %1616 = vmatprep.subr.bf16.mxu0 %v1527
        %1617 = vmatpush2.bf16.msra.mxu0 %v1526
        %1618 = vmatprep.subr.bf16.mxu0 %v1525
        %1619 = vmatpush2.bf16.msra.mxu0 %v1524
        %1620 = vmatprep.subr.bf16.mxu0 %v1523
        %1621 = vmatpush2.bf16.msra.mxu0 %v1522
        %1622 = vmatprep.subr.bf16.mxu0 %v1521
        %1623 = vmatpush2.bf16.msra.mxu0 %v1520
        %1624 = vmatprep.subr.bf16.mxu0 %v1519
        %1625 = vmatpush2.bf16.msra.mxu0 %v1518
        %1626 = vmatprep.subr.bf16.mxu0 %v1517
        %1627 = vmatpush2.bf16.msra.mxu0 %v1516
        %1628 = vmatprep.mubr.bf16.mxu0 %v1343
        %1629 = vmatmul.mubr.bf16.gmra.mxu0 %v1342
        %v1630 = vpop.f32.mrf.mxu0
        %v1631 = vadd.f32 %v1349, %v1630
        %v1632 = vpop.f32.mrf.mxu0
        %v1633 = vadd.f32 %v1353, %v1632
        %v1634 = vpop.f32.mrf.mxu0
        %v1635 = vpop.f32.mrf.mxu0
        %1636 = vdwg.mxu0
        %1637 = vmatprep.subr.bf16.mxu0 %v1547
        %1638 = vmatpush1.bf16.msra.mxu0 %v1546
        %1639 = vmatprep.subr.bf16.mxu0 %v1545
        %1640 = vmatpush1.bf16.msra.mxu0 %v1544
        %1641 = vmatprep.subr.bf16.mxu0 %v1543
        %1642 = vmatpush1.bf16.msra.mxu0 %v1542
        %1643 = vmatprep.subr.bf16.mxu0 %v1541
        %1644 = vmatpush1.bf16.msra.mxu0 %v1540
        %1645 = vmatprep.subr.bf16.mxu0 %v1539
        %1646 = vmatpush1.bf16.msra.mxu0 %v1538
        %1647 = vmatprep.subr.bf16.mxu0 %v1537
        %1648 = vmatpush1.bf16.msra.mxu0 %v1536
        %1649 = vmatprep.subr.bf16.mxu0 %v1535
        %1650 = vmatpush1.bf16.msra.mxu0 %v1534
        %1651 = vmatprep.subr.bf16.mxu0 %v1533
        %1652 = vmatpush1.bf16.msra.mxu0 %v1532
        %1653 = vmatprep.subr.bf16.mxu0 0
        %1654 = vmatpush2.bf16.msra.mxu0 0
        %1655 = vmatprep.subr.bf16.mxu0 0
        %1656 = vmatpush2.bf16.msra.mxu0 0
        %1657 = vmatprep.subr.bf16.mxu0 0
        %1658 = vmatpush2.bf16.msra.mxu0 0
        %1659 = vmatprep.subr.bf16.mxu0 0
        %1660 = vmatpush2.bf16.msra.mxu0 0
        %1661 = vmatprep.subr.bf16.mxu0 0
        %1662 = vmatpush2.bf16.msra.mxu0 0
        %1663 = vmatprep.subr.bf16.mxu0 0
        %1664 = vmatpush2.bf16.msra.mxu0 0
        %1665 = vmatprep.subr.bf16.mxu0 0
        %1666 = vmatpush2.bf16.msra.mxu0 0
        %1667 = vmatprep.subr.bf16.mxu0 0
        %1668 = vmatpush2.bf16.msra.mxu0 0
        %1669 = vmatprep.mubr.bf16.mxu0 0
        %1670 = vmatmul.mubr.bf16.gmra.mxu0 %v1344
        %v1671 = vpop.f32.mrf.mxu0
        %v1672 = vadd.f32 %v1631, %v1671
        %v1673 = vpop.f32.mrf.mxu0
        %v1674 = vadd.f32 %v1633, %v1673
        %v1675 = vpop.f32.mrf.mxu0
        %v1676 = vpop.f32.mrf.mxu0
        %1677 = vdwg.mxu0
        %v1678 = vmax.f32 %v1672, 0.0
        %v1679 = vmax.f32 %v1674, 0.0
        %v1680 = vpack.c.bf16 %v1678, %v1678
        %v1681 = vpack.c.bf16 %v1679, %v1679
        %v1683 = vlaneseq
        %v1684 = vshrl.u32 %v1683, 7
        %v1685 = vsub.s32 0, %v1684
        %v1686 = vrot.slane %v935, %v1685
        %v1720 = vunpack.c.l.b16 %v903
        %v1721 = vunpack.c.l.b16 %v904
        %v1722 = vunpack.c.l.b16 %v905
        %v1723 = vunpack.c.l.b16 %v906
        %v1724 = vunpack.c.l.b16 %v907
        %v1725 = vunpack.c.l.b16 %v908
        %v1726 = vunpack.c.l.b16 %v909
        %v1727 = vunpack.c.l.b16 %v910
        %v1728 = vunpack.c.l.b16 %v911
        %v1729 = vunpack.c.l.b16 %v912
        %v1730 = vunpack.c.l.b16 %v913
        %v1731 = vunpack.c.l.b16 %v914
        %v1732 = vunpack.c.l.b16 %v915
        %v1733 = vunpack.c.l.b16 %v916
        %v1734 = vunpack.c.l.b16 %v917
        %v1735 = vunpack.c.l.b16 %v918
        %v1736 = vunpack.c.l.b16 %v919
        %v1737 = vunpack.c.l.b16 %v920
        %v1738 = vunpack.c.l.b16 %v921
        %v1739 = vunpack.c.l.b16 %v922
        %v1740 = vunpack.c.l.b16 %v923
        %v1741 = vunpack.c.l.b16 %v924
        %v1742 = vunpack.c.l.b16 %v925
        %v1743 = vunpack.c.l.b16 %v926
        %v1744 = vunpack.c.l.b16 %v927
        %v1745 = vunpack.c.l.b16 %v928
        %v1746 = vunpack.c.l.b16 %v929
        %v1747 = vunpack.c.l.b16 %v930
        %v1748 = vunpack.c.l.b16 %v931
        %v1749 = vunpack.c.l.b16 %v932
        %v1750 = vunpack.c.l.b16 %v933
        %v1751 = vunpack.c.l.b16 %v934
        %v1752 = vpack.c.b16 %v1721, %v1720
        %v1753 = vpack.c.b16 %v1723, %v1722
        %v1754 = vpack.c.b16 %v1725, %v1724
        %v1755 = vpack.c.b16 %v1727, %v1726
        %v1756 = vpack.c.b16 %v1729, %v1728
        %v1757 = vpack.c.b16 %v1731, %v1730
        %v1758 = vpack.c.b16 %v1733, %v1732
        %v1759 = vpack.c.b16 %v1735, %v1734
        %v1760 = vpack.c.b16 %v1737, %v1736
        %v1761 = vpack.c.b16 %v1739, %v1738
        %v1762 = vpack.c.b16 %v1741, %v1740
        %v1763 = vpack.c.b16 %v1743, %v1742
        %v1764 = vpack.c.b16 %v1745, %v1744
        %v1765 = vpack.c.b16 %v1747, %v1746
        %v1766 = vpack.c.b16 %v1749, %v1748
        %v1767 = vpack.c.b16 %v1751, %v1750
        %1784 = vmatprep.subr.bf16.mxu0 0
        %1785 = vmatpush1.bf16.msra.mxu0 %v1759
        %1786 = vmatprep.subr.bf16.mxu0 0
        %1787 = vmatpush1.bf16.msra.mxu0 %v1758
        %1788 = vmatprep.subr.bf16.mxu0 0
        %1789 = vmatpush1.bf16.msra.mxu0 %v1757
        %1790 = vmatprep.subr.bf16.mxu0 0
        %1791 = vmatpush1.bf16.msra.mxu0 %v1756
        %1792 = vmatprep.subr.bf16.mxu0 0
        %1793 = vmatpush1.bf16.msra.mxu0 %v1755
        %1794 = vmatprep.subr.bf16.mxu0 0
        %1795 = vmatpush1.bf16.msra.mxu0 %v1754
        %1796 = vmatprep.subr.bf16.mxu0 0
        %1797 = vmatpush1.bf16.msra.mxu0 %v1753
        %1798 = vmatprep.subr.bf16.mxu0 0
        %1799 = vmatpush1.bf16.msra.mxu0 %v1752
        %1800 = vmatprep.subr.bf16.mxu0 0
        %1801 = vmatpush2.bf16.msra.mxu0 %v1767
        %1802 = vmatprep.subr.bf16.mxu0 0
        %1803 = vmatpush2.bf16.msra.mxu0 %v1766
        %1804 = vmatprep.subr.bf16.mxu0 0
        %1805 = vmatpush2.bf16.msra.mxu0 %v1765
        %1806 = vmatprep.subr.bf16.mxu0 0
        %1807 = vmatpush2.bf16.msra.mxu0 %v1764
        %1808 = vmatprep.subr.bf16.mxu0 0
        %1809 = vmatpush2.bf16.msra.mxu0 %v1763
        %1810 = vmatprep.subr.bf16.mxu0 0
        %1811 = vmatpush2.bf16.msra.mxu0 %v1762
        %1812 = vmatprep.subr.bf16.mxu0 0
        %1813 = vmatpush2.bf16.msra.mxu0 %v1761
        %1814 = vmatprep.subr.bf16.mxu0 0
        %1815 = vmatpush2.bf16.msra.mxu0 %v1760
        %1816 = vmatprep.mubr.bf16.mxu0 %v1681
        %1817 = vmatmul.mubr.bf16.gmra.mxu0 %v1680
        %v1818 = vpop.f32.mrf.mxu0
        %v1819 = vadd.f32 %v1686, %v1818
        %v1820 = vpop.f32.mrf.mxu0
        %v1821 = vpop.f32.mrf.mxu0
        %v1822 = vpop.f32.mrf.mxu0
        %1823 = vdwg.mxu0
        %v1824 = vmax.f32 %v1819, 0.0
        %v1826 = vlaneseq
        %v1827 = vshrl.u32 %v1826, 7
        %v1828 = vsub.s32 0, %v1827
        %v1829 = vrot.slane %v936, %v1828
        %v1831 = vmul.f32 %v1824, %v1829
        %1832 = vadd.xlane.f32.xlu0 %v1831
        %v1833 = vpop.xlane.xlu0 %1832
        %v1835 = vlaneseq
        %v1836 = vshrl.u32 %v1835, 7
        %v1837 = vsub.s32 0, %v1836
        %v1838 = vrot.slane %v938, %v1837
        %v1840 = vadd.f32 %v1833, %v1838
        %v1842 = vlaneseq
        %v1843 = vshrl.u32 %v1842, 7
        %v1844 = vsub.s32 0, %v1843
        %v1845 = vrot.slane %v937, %v1844
        %v1847 = vmul.f32 %v1824, %v1845
        %1848 = vadd.xlane.f32.xlu0 %v1847
        %v1849 = vpop.xlane.xlu0 %1848
        %v1851 = vlaneseq
        %v1852 = vshrl.u32 %v1851, 7
        %v1853 = vsub.s32 0, %v1852
        %v1854 = vrot.slane %v939, %v1853
        %v1856 = vadd.f32 %v1849, %v1854
        %v1857 = vmax.f32 %v1840, 0.0
        %v1859 = vlaneseq
        %v1860 = vshrl.u32 %v1859, 7
        %v1861 = vsub.s32 0, %v1860
        %v1862 = vrot.slane %v940, %v1861
        %v1864 = vmul.f32 %v1857, %v1862
        %v1865 = vmax.f32 %v1856, 0.0
        %v1867 = vlaneseq
        %v1868 = vshrl.u32 %v1867, 7
        %v1869 = vsub.s32 0, %v1868
        %v1870 = vrot.slane %v941, %v1869
        %v1872 = vmul.f32 %v1865, %v1870
        %v1873 = vadd.f32 %v1864, %v1872
        %v1875 = vlaneseq
        %v1876 = vshrl.u32 %v1875, 7
        %v1877 = vsub.s32 0, %v1876
        %v1878 = vrot.slane %v942, %v1877
        %v1880 = vadd.f32 %v1873, %v1878
        %v1881 = vpack.c.bf16 %v1339, %v1339
        %v1882 = vpack.c.bf16 %v1340, %v1340
        %v1883 = vpack.c.bf16 %v1341, %v1341
        %v1885 = vlaneseq
        %v1886 = vshrl.u32 %v1885, 7
        %v1887 = vsub.s32 0, %v1886
        %v1888 = vrot.slane %v991, %v1887
        %v1889 = vlaneseq
        %v1890 = vshrl.u32 %v1889, 7
        %v1891 = vsub.s32 1, %v1890
        %v1892 = vrot.slane %v991, %v1891
        %v1943 = vunpack.c.l.b16 %v943
        %v1944 = vunpack.c.h.b16 %v943
        %v1945 = vunpack.c.l.b16 %v944
        %v1946 = vunpack.c.h.b16 %v944
        %v1947 = vunpack.c.l.b16 %v945
        %v1948 = vunpack.c.h.b16 %v945
        %v1949 = vunpack.c.l.b16 %v946
        %v1950 = vunpack.c.h.b16 %v946
        %v1951 = vunpack.c.l.b16 %v947
        %v1952 = vunpack.c.h.b16 %v947
        %v1953 = vunpack.c.l.b16 %v948
        %v1954 = vunpack.c.h.b16 %v948
        %v1955 = vunpack.c.l.b16 %v949
        %v1956 = vunpack.c.h.b16 %v949
        %v1957 = vunpack.c.l.b16 %v950
        %v1958 = vunpack.c.h.b16 %v950
        %v1959 = vunpack.c.l.b16 %v951
        %v1960 = vunpack.c.h.b16 %v951
        %v1961 = vunpack.c.l.b16 %v952
        %v1962 = vunpack.c.h.b16 %v952
        %v1963 = vunpack.c.l.b16 %v953
        %v1964 = vunpack.c.h.b16 %v953
        %v1965 = vunpack.c.l.b16 %v954
        %v1966 = vunpack.c.h.b16 %v954
        %v1967 = vunpack.c.l.b16 %v955
        %v1968 = vunpack.c.h.b16 %v955
        %v1969 = vunpack.c.l.b16 %v956
        %v1970 = vunpack.c.h.b16 %v956
        %v1971 = vunpack.c.l.b16 %v957
        %v1972 = vunpack.c.h.b16 %v957
        %v1973 = vunpack.c.l.b16 %v958
        %v1974 = vunpack.c.h.b16 %v958
        %v1975 = vunpack.c.l.b16 %v959
        %v1976 = vunpack.c.h.b16 %v959
        %v1977 = vunpack.c.l.b16 %v960
        %v1978 = vunpack.c.h.b16 %v960
        %v1979 = vunpack.c.l.b16 %v961
        %v1980 = vunpack.c.h.b16 %v961
        %v1981 = vunpack.c.l.b16 %v962
        %v1982 = vunpack.c.h.b16 %v962
        %v1983 = vunpack.c.l.b16 %v963
        %v1984 = vunpack.c.h.b16 %v963
        %v1985 = vunpack.c.l.b16 %v964
        %v1986 = vunpack.c.h.b16 %v964
        %v1987 = vunpack.c.l.b16 %v965
        %v1988 = vunpack.c.h.b16 %v965
        %v1989 = vunpack.c.l.b16 %v966
        %v1990 = vunpack.c.h.b16 %v966
        %v1991 = vunpack.c.l.b16 %v967
        %v1992 = vunpack.c.h.b16 %v967
        %v1993 = vunpack.c.l.b16 %v968
        %v1994 = vunpack.c.h.b16 %v968
        %v1995 = vunpack.c.l.b16 %v969
        %v1996 = vunpack.c.h.b16 %v969
        %v1997 = vunpack.c.l.b16 %v970
        %v1998 = vunpack.c.h.b16 %v970
        %v1999 = vunpack.c.l.b16 %v971
        %v2000 = vunpack.c.h.b16 %v971
        %v2001 = vunpack.c.l.b16 %v972
        %v2002 = vunpack.c.h.b16 %v972
        %v2003 = vunpack.c.l.b16 %v973
        %v2004 = vunpack.c.h.b16 %v973
        %v2005 = vunpack.c.l.b16 %v974
        %v2006 = vunpack.c.h.b16 %v974
        %v2007 = vunpack.c.l.b16 %v975
        %v2008 = vunpack.c.h.b16 %v975
        %v2009 = vunpack.c.l.b16 %v976
        %v2010 = vunpack.c.h.b16 %v976
        %v2011 = vunpack.c.l.b16 %v977
        %v2012 = vunpack.c.h.b16 %v977
        %v2013 = vunpack.c.l.b16 %v978
        %v2014 = vunpack.c.h.b16 %v978
        %v2015 = vunpack.c.l.b16 %v979
        %v2016 = vunpack.c.h.b16 %v979
        %v2017 = vunpack.c.l.b16 %v980
        %v2018 = vunpack.c.h.b16 %v980
        %v2019 = vunpack.c.l.b16 %v981
        %v2020 = vunpack.c.h.b16 %v981
        %v2021 = vunpack.c.l.b16 %v982
        %v2022 = vunpack.c.h.b16 %v982
        %v2023 = vunpack.c.l.b16 %v983
        %v2024 = vunpack.c.h.b16 %v983
        %v2025 = vunpack.c.l.b16 %v984
        %v2026 = vunpack.c.h.b16 %v984
        %v2027 = vunpack.c.l.b16 %v985
        %v2028 = vunpack.c.h.b16 %v985
        %v2029 = vunpack.c.l.b16 %v986
        %v2030 = vunpack.c.h.b16 %v986
        %v2031 = vunpack.c.l.b16 %v987
        %v2032 = vunpack.c.h.b16 %v987
        %v2033 = vunpack.c.l.b16 %v988
        %v2034 = vunpack.c.h.b16 %v988
        %v2035 = vunpack.c.l.b16 %v989
        %v2036 = vunpack.c.h.b16 %v989
        %v2037 = vunpack.c.l.b16 %v990
        %v2038 = vunpack.c.h.b16 %v990
        %v2039 = vpack.c.b16 %v1945, %v1943
        %v2040 = vpack.c.b16 %v1946, %v1944
        %v2041 = vpack.c.b16 %v1949, %v1947
        %v2042 = vpack.c.b16 %v1950, %v1948
        %v2043 = vpack.c.b16 %v1953, %v1951
        %v2044 = vpack.c.b16 %v1954, %v1952
        %v2045 = vpack.c.b16 %v1957, %v1955
        %v2046 = vpack.c.b16 %v1958, %v1956
        %v2047 = vpack.c.b16 %v1961, %v1959
        %v2048 = vpack.c.b16 %v1962, %v1960
        %v2049 = vpack.c.b16 %v1965, %v1963
        %v2050 = vpack.c.b16 %v1966, %v1964
        %v2051 = vpack.c.b16 %v1969, %v1967
        %v2052 = vpack.c.b16 %v1970, %v1968
        %v2053 = vpack.c.b16 %v1973, %v1971
        %v2054 = vpack.c.b16 %v1974, %v1972
        %v2055 = vpack.c.b16 %v1977, %v1975
        %v2056 = vpack.c.b16 %v1978, %v1976
        %v2057 = vpack.c.b16 %v1981, %v1979
        %v2058 = vpack.c.b16 %v1982, %v1980
        %v2059 = vpack.c.b16 %v1985, %v1983
        %v2060 = vpack.c.b16 %v1986, %v1984
        %v2061 = vpack.c.b16 %v1989, %v1987
        %v2062 = vpack.c.b16 %v1990, %v1988
        %v2063 = vpack.c.b16 %v1993, %v1991
        %v2064 = vpack.c.b16 %v1994, %v1992
        %v2065 = vpack.c.b16 %v1997, %v1995
        %v2066 = vpack.c.b16 %v1998, %v1996
        %v2067 = vpack.c.b16 %v2001, %v1999
        %v2068 = vpack.c.b16 %v2002, %v2000
        %v2069 = vpack.c.b16 %v2005, %v2003
        %v2070 = vpack.c.b16 %v2006, %v2004
        %v2071 = vpack.c.b16 %v2009, %v2007
        %v2072 = vpack.c.b16 %v2010, %v2008
        %v2073 = vpack.c.b16 %v2013, %v2011
        %v2074 = vpack.c.b16 %v2014, %v2012
        %v2075 = vpack.c.b16 %v2017, %v2015
        %v2076 = vpack.c.b16 %v2018, %v2016
        %v2077 = vpack.c.b16 %v2021, %v2019
        %v2078 = vpack.c.b16 %v2022, %v2020
        %v2079 = vpack.c.b16 %v2025, %v2023
        %v2080 = vpack.c.b16 %v2026, %v2024
        %v2081 = vpack.c.b16 %v2029, %v2027
        %v2082 = vpack.c.b16 %v2030, %v2028
        %v2083 = vpack.c.b16 %v2033, %v2031
        %v2084 = vpack.c.b16 %v2034, %v2032
        %v2085 = vpack.c.b16 %v2037, %v2035
        %v2086 = vpack.c.b16 %v2038, %v2036
        %2135 = vmatprep.subr.bf16.mxu0 %v2054
        %2136 = vmatpush1.bf16.msra.mxu0 %v2053
        %2137 = vmatprep.subr.bf16.mxu0 %v2052
        %2138 = vmatpush1.bf16.msra.mxu0 %v2051
        %2139 = vmatprep.subr.bf16.mxu0 %v2050
        %2140 = vmatpush1.bf16.msra.mxu0 %v2049
        %2141 = vmatprep.subr.bf16.mxu0 %v2048
        %2142 = vmatpush1.bf16.msra.mxu0 %v2047
        %2143 = vmatprep.subr.bf16.mxu0 %v2046
        %2144 = vmatpush1.bf16.msra.mxu0 %v2045
        %2145 = vmatprep.subr.bf16.mxu0 %v2044
        %2146 = vmatpush1.bf16.msra.mxu0 %v2043
        %2147 = vmatprep.subr.bf16.mxu0 %v2042
        %2148 = vmatpush1.bf16.msra.mxu0 %v2041
        %2149 = vmatprep.subr.bf16.mxu0 %v2040
        %2150 = vmatpush1.bf16.msra.mxu0 %v2039
        %2151 = vmatprep.subr.bf16.mxu0 %v2070
        %2152 = vmatpush2.bf16.msra.mxu0 %v2069
        %2153 = vmatprep.subr.bf16.mxu0 %v2068
        %2154 = vmatpush2.bf16.msra.mxu0 %v2067
        %2155 = vmatprep.subr.bf16.mxu0 %v2066
        %2156 = vmatpush2.bf16.msra.mxu0 %v2065
        %2157 = vmatprep.subr.bf16.mxu0 %v2064
        %2158 = vmatpush2.bf16.msra.mxu0 %v2063
        %2159 = vmatprep.subr.bf16.mxu0 %v2062
        %2160 = vmatpush2.bf16.msra.mxu0 %v2061
        %2161 = vmatprep.subr.bf16.mxu0 %v2060
        %2162 = vmatpush2.bf16.msra.mxu0 %v2059
        %2163 = vmatprep.subr.bf16.mxu0 %v2058
        %2164 = vmatpush2.bf16.msra.mxu0 %v2057
        %2165 = vmatprep.subr.bf16.mxu0 %v2056
        %2166 = vmatpush2.bf16.msra.mxu0 %v2055
        %2167 = vmatprep.mubr.bf16.mxu0 %v1882
        %2168 = vmatmul.mubr.bf16.gmra.mxu0 %v1881
        %v2169 = vpop.f32.mrf.mxu0
        %v2170 = vadd.f32 %v1888, %v2169
        %v2171 = vpop.f32.mrf.mxu0
        %v2172 = vadd.f32 %v1892, %v2171
        %v2173 = vpop.f32.mrf.mxu0
        %v2174 = vpop.f32.mrf.mxu0
        %2175 = vdwg.mxu0
        %2176 = vmatprep.subr.bf16.mxu0 %v2086
        %2177 = vmatpush1.bf16.msra.mxu0 %v2085
        %2178 = vmatprep.subr.bf16.mxu0 %v2084
        %2179 = vmatpush1.bf16.msra.mxu0 %v2083
        %2180 = vmatprep.subr.bf16.mxu0 %v2082
        %2181 = vmatpush1.bf16.msra.mxu0 %v2081
        %2182 = vmatprep.subr.bf16.mxu0 %v2080
        %2183 = vmatpush1.bf16.msra.mxu0 %v2079
        %2184 = vmatprep.subr.bf16.mxu0 %v2078
        %2185 = vmatpush1.bf16.msra.mxu0 %v2077
        %2186 = vmatprep.subr.bf16.mxu0 %v2076
        %2187 = vmatpush1.bf16.msra.mxu0 %v2075
        %2188 = vmatprep.subr.bf16.mxu0 %v2074
        %2189 = vmatpush1.bf16.msra.mxu0 %v2073
        %2190 = vmatprep.subr.bf16.mxu0 %v2072
        %2191 = vmatpush1.bf16.msra.mxu0 %v2071
        %2192 = vmatprep.subr.bf16.mxu0 0
        %2193 = vmatpush2.bf16.msra.mxu0 0
        %2194 = vmatprep.subr.bf16.mxu0 0
        %2195 = vmatpush2.bf16.msra.mxu0 0
        %2196 = vmatprep.subr.bf16.mxu0 0
        %2197 = vmatpush2.bf16.msra.mxu0 0
        %2198 = vmatprep.subr.bf16.mxu0 0
        %2199 = vmatpush2.bf16.msra.mxu0 0
        %2200 = vmatprep.subr.bf16.mxu0 0
        %2201 = vmatpush2.bf16.msra.mxu0 0
        %2202 = vmatprep.subr.bf16.mxu0 0
        %2203 = vmatpush2.bf16.msra.mxu0 0
        %2204 = vmatprep.subr.bf16.mxu0 0
        %2205 = vmatpush2.bf16.msra.mxu0 0
        %2206 = vmatprep.subr.bf16.mxu0 0
        %2207 = vmatpush2.bf16.msra.mxu0 0
        %2208 = vmatprep.mubr.bf16.mxu0 0
        %2209 = vmatmul.mubr.bf16.gmra.mxu0 %v1883
        %v2210 = vpop.f32.mrf.mxu0
        %v2211 = vadd.f32 %v2170, %v2210
        %v2212 = vpop.f32.mrf.mxu0
        %v2213 = vadd.f32 %v2172, %v2212
        %v2214 = vpop.f32.mrf.mxu0
        %v2215 = vpop.f32.mrf.mxu0
        %2216 = vdwg.mxu0
        %v2217 = vmax.f32 %v2211, 0.0
        %v2218 = vmax.f32 %v2213, 0.0
        %v2219 = vpack.c.bf16 %v2217, %v2217
        %v2220 = vpack.c.bf16 %v2218, %v2218
        %v2222 = vlaneseq
        %v2223 = vshrl.u32 %v2222, 7
        %v2224 = vsub.s32 0, %v2223
        %v2225 = vrot.slane %v1024, %v2224
        %v2259 = vunpack.c.l.b16 %v992
        %v2260 = vunpack.c.l.b16 %v993
        %v2261 = vunpack.c.l.b16 %v994
        %v2262 = vunpack.c.l.b16 %v995
        %v2263 = vunpack.c.l.b16 %v996
        %v2264 = vunpack.c.l.b16 %v997
        %v2265 = vunpack.c.l.b16 %v998
        %v2266 = vunpack.c.l.b16 %v999
        %v2267 = vunpack.c.l.b16 %v1000
        %v2268 = vunpack.c.l.b16 %v1001
        %v2269 = vunpack.c.l.b16 %v1002
        %v2270 = vunpack.c.l.b16 %v1003
        %v2271 = vunpack.c.l.b16 %v1004
        %v2272 = vunpack.c.l.b16 %v1005
        %v2273 = vunpack.c.l.b16 %v1006
        %v2274 = vunpack.c.l.b16 %v1007
        %v2275 = vunpack.c.l.b16 %v1008
        %v2276 = vunpack.c.l.b16 %v1009
        %v2277 = vunpack.c.l.b16 %v1010
        %v2278 = vunpack.c.l.b16 %v1011
        %v2279 = vunpack.c.l.b16 %v1012
        %v2280 = vunpack.c.l.b16 %v1013
        %v2281 = vunpack.c.l.b16 %v1014
        %v2282 = vunpack.c.l.b16 %v1015
        %v2283 = vunpack.c.l.b16 %v1016
        %v2284 = vunpack.c.l.b16 %v1017
        %v2285 = vunpack.c.l.b16 %v1018
        %v2286 = vunpack.c.l.b16 %v1019
        %v2287 = vunpack.c.l.b16 %v1020
        %v2288 = vunpack.c.l.b16 %v1021
        %v2289 = vunpack.c.l.b16 %v1022
        %v2290 = vunpack.c.l.b16 %v1023
        %v2291 = vpack.c.b16 %v2260, %v2259
        %v2292 = vpack.c.b16 %v2262, %v2261
        %v2293 = vpack.c.b16 %v2264, %v2263
        %v2294 = vpack.c.b16 %v2266, %v2265
        %v2295 = vpack.c.b16 %v2268, %v2267
        %v2296 = vpack.c.b16 %v2270, %v2269
        %v2297 = vpack.c.b16 %v2272, %v2271
        %v2298 = vpack.c.b16 %v2274, %v2273
        %v2299 = vpack.c.b16 %v2276, %v2275
        %v2300 = vpack.c.b16 %v2278, %v2277
        %v2301 = vpack.c.b16 %v2280, %v2279
        %v2302 = vpack.c.b16 %v2282, %v2281
        %v2303 = vpack.c.b16 %v2284, %v2283
        %v2304 = vpack.c.b16 %v2286, %v2285
        %v2305 = vpack.c.b16 %v2288, %v2287
        %v2306 = vpack.c.b16 %v2290, %v2289
        %2323 = vmatprep.subr.bf16.mxu0 0
        %2324 = vmatpush1.bf16.msra.mxu0 %v2298
        %2325 = vmatprep.subr.bf16.mxu0 0
        %2326 = vmatpush1.bf16.msra.mxu0 %v2297
        %2327 = vmatprep.subr.bf16.mxu0 0
        %2328 = vmatpush1.bf16.msra.mxu0 %v2296
        %2329 = vmatprep.subr.bf16.mxu0 0
        %2330 = vmatpush1.bf16.msra.mxu0 %v2295
        %2331 = vmatprep.subr.bf16.mxu0 0
        %2332 = vmatpush1.bf16.msra.mxu0 %v2294
        %2333 = vmatprep.subr.bf16.mxu0 0
        %2334 = vmatpush1.bf16.msra.mxu0 %v2293
        %2335 = vmatprep.subr.bf16.mxu0 0
        %2336 = vmatpush1.bf16.msra.mxu0 %v2292
        %2337 = vmatprep.subr.bf16.mxu0 0
        %2338 = vmatpush1.bf16.msra.mxu0 %v2291
        %2339 = vmatprep.subr.bf16.mxu0 0
        %2340 = vmatpush2.bf16.msra.mxu0 %v2306
        %2341 = vmatprep.subr.bf16.mxu0 0
        %2342 = vmatpush2.bf16.msra.mxu0 %v2305
        %2343 = vmatprep.subr.bf16.mxu0 0
        %2344 = vmatpush2.bf16.msra.mxu0 %v2304
        %2345 = vmatprep.subr.bf16.mxu0 0
        %2346 = vmatpush2.bf16.msra.mxu0 %v2303
        %2347 = vmatprep.subr.bf16.mxu0 0
        %2348 = vmatpush2.bf16.msra.mxu0 %v2302
        %2349 = vmatprep.subr.bf16.mxu0 0
        %2350 = vmatpush2.bf16.msra.mxu0 %v2301
        %2351 = vmatprep.subr.bf16.mxu0 0
        %2352 = vmatpush2.bf16.msra.mxu0 %v2300
        %2353 = vmatprep.subr.bf16.mxu0 0
        %2354 = vmatpush2.bf16.msra.mxu0 %v2299
        %2355 = vmatprep.mubr.bf16.mxu0 %v2220
        %2356 = vmatmul.mubr.bf16.gmra.mxu0 %v2219
        %v2357 = vpop.f32.mrf.mxu0
        %v2358 = vadd.f32 %v2225, %v2357
        %v2359 = vpop.f32.mrf.mxu0
        %v2360 = vpop.f32.mrf.mxu0
        %v2361 = vpop.f32.mrf.mxu0
        %2362 = vdwg.mxu0
        %v2363 = vmax.f32 %v2358, 0.0
        %v2365 = vlaneseq
        %v2366 = vshrl.u32 %v2365, 7
        %v2367 = vsub.s32 0, %v2366
        %v2368 = vrot.slane %v1025, %v2367
        %v2370 = vmul.f32 %v2363, %v2368
        %2371 = vadd.xlane.f32.xlu0 %v2370
        %v2372 = vpop.xlane.xlu0 %2371
        %v2374 = vlaneseq
        %v2375 = vshrl.u32 %v2374, 7
        %v2376 = vsub.s32 0, %v2375
        %v2377 = vrot.slane %v1027, %v2376
        %v2379 = vadd.f32 %v2372, %v2377
        %v2381 = vlaneseq
        %v2382 = vshrl.u32 %v2381, 7
        %v2383 = vsub.s32 0, %v2382
        %v2384 = vrot.slane %v1026, %v2383
        %v2386 = vmul.f32 %v2363, %v2384
        %2387 = vadd.xlane.f32.xlu0 %v2386
        %v2388 = vpop.xlane.xlu0 %2387
        %v2390 = vlaneseq
        %v2391 = vshrl.u32 %v2390, 7
        %v2392 = vsub.s32 0, %v2391
        %v2393 = vrot.slane %v1028, %v2392
        %v2395 = vadd.f32 %v2388, %v2393
        %v2396 = vmax.f32 %v2379, 0.0
        %v2398 = vlaneseq
        %v2399 = vshrl.u32 %v2398, 7
        %v2400 = vsub.s32 0, %v2399
        %v2401 = vrot.slane %v1029, %v2400
        %v2403 = vmul.f32 %v2396, %v2401
        %v2404 = vmax.f32 %v2395, 0.0
        %v2406 = vlaneseq
        %v2407 = vshrl.u32 %v2406, 7
        %v2408 = vsub.s32 0, %v2407
        %v2409 = vrot.slane %v1030, %v2408
        %v2411 = vmul.f32 %v2404, %v2409
        %v2412 = vadd.f32 %v2403, %v2411
        %v2414 = vlaneseq
        %v2415 = vshrl.u32 %v2414, 7
        %v2416 = vsub.s32 0, %v2415
        %v2417 = vrot.slane %v1031, %v2416
        %v2419 = vadd.f32 %v2412, %v2417
        %v2420 = vlaneseq
        %v2421 = vand.u32 %v2420, 127
        %vm2422 = vcmp.eq.s32.totalorder %v2421, 0
        %2424 = vset.pattern.permute.xlu0 0
        %2425 = vperm.xlu0 %2424, %v1880
        %v2426 = vpop.permute.xlu0 %2425
        %2429 = vset.pattern.permute.xlu0 0
        %2430 = vperm.xlu0 %2429, %v2419
        %v2431 = vpop.permute.xlu0 %2430
        %v2433 = vsel %vm2422, %v2426, %v2431
        %vm2434 = vcmask 15360
        %2435 = vst.msk [vmem:[%s852] sm:$0xff] %vm2434, %v2433
        %p2436 = scmp.lt.s32.totalorder %s59, 1
        %s2437 = scalar_select %p2436, %s59, 1
        %s2438 = smul.addr %s2437, 8
        %s2439 = scalar_lea.vmem %s25, %s2438
        // Predicated region
        $region141: #{tpu_custom_call.1} parent=119 // pred_check
          %p2440 = pneg %p607
        $region142: #{tpu_custom_call.1} parent=119 // pred_check_branch
          %2442 = sbr.rel (%p2440) target = $region144
        $region143: #{tpu_custom_call.1} parent=119 // pred_region
          _
        $region144: #{tpu_custom_call.1} parent=119 // pred_fallthru
          _
      $region120: #{tpu_custom_call.1} parent=5 // pred_fallthru
        _
      %p2443 = scmp.le.s32.totalorder 2, %s54
      // Predicated region
      $region145: #{tpu_custom_call.1} parent=5 // pred_check
        %p2444 = pneg %p2443
      $region146: #{tpu_custom_call.1} parent=5 // pred_check_branch
        %2446 = sbr.rel (%p2444) target = $region148
      $region147: #{tpu_custom_call.1} parent=5 // pred_region
        %s2447 = ssub.s32 %s54, 2
        // Predicated region
        $region149: #{tpu_custom_call.1} parent=147 // pred_check
          %p2448 = pneg %p613
        $region150: #{tpu_custom_call.1} parent=147 // pred_check_branch
          %2450 = sbr.rel (%p2448) target = $region152
        $region151: #{tpu_custom_call.1} parent=147 // pred_region
          %p2451 = scmp.lt.s32.totalorder %s60, 1
          %s2452 = scalar_select %p2451, %s60, 1
          %s2453 = smul.addr %s2452, 8
          %s2454 = scalar_lea.vmem %s25, %s2453
        $region152: #{tpu_custom_call.1} parent=147 // pred_fallthru
          _
      $region148: #{tpu_custom_call.1} parent=5 // pred_fallthru
        _
    $region6: #{tpu_custom_call.1} parent=1 // loop_footer
      %s58 = sadd.s32 1, %s54
    $region7: #{tpu_custom_call.1} parent=1 // loop_footer_branch
      %53 = sbr.rel target = $region3
    $region8: #{tpu_custom_call.1} parent=1 // loop_exit
      _
    %2455 = vsyncpa [#allocation13], 1
    %s2456 = scalar_lea.sflag [#allocation13], 1
    %2457 = vsyncpa %s2456, 1
    %2458 = vsyncpa [#allocation15], 1
    %2459 = vsyncpa [#allocation18], 1

</llo_original>
